<compile_context>
chip_gen: v7x
topology: tpu7x:2x2x1
jax: 0.10.0
libtpu: 0.0.40
codegen_flags: <defaults>
</compile_context>

<pallas_src>
import math

import jax
import jax.numpy as jnp
from jax.experimental import pallas as pl
from jax.experimental.pallas import tpu as pltpu


def _spp_level_params(num_levels, h, w):
    """Static per-level pooling parameters, mirroring the PyTorch math."""
    params = []
    for i in range(num_levels):
        level = i + 1
        kh = math.ceil(h / level)
        kw = math.ceil(w / level)
        sh, sw = kh, kw
        ph = math.floor((kh * level - h + 1) / 2)
        pw = math.floor((kw * level - w + 1) / 2)
        out_h = (h + 2 * ph - kh) // sh + 1
        out_w = (w + 2 * pw - kw) // sw + 1
        params.append((kh, kw, sh, sw, ph, pw, out_h, out_w))
    return params


def _window_bounds(o, stride, pad, k, size):
    lo = o * stride - pad
    hi = min(lo + k, size)
    lo = max(lo, 0)
    return lo, hi


def _validate_windows(params, H, W):
    """Guard the clip-window == -inf-padding equivalence regime."""
    for (kh, kw, sh, sw, ph, pw, oh, ow) in params:
        if 2 * ph > kh or 2 * pw > kw:
            raise ValueError(
                "padding > kernel/2; PyTorch max_pool2d rejects this config")
        for oy in range(oh):
            h0, h1 = _window_bounds(oy, sh, ph, kh, H)
            if h1 <= h0:
                raise ValueError("degenerate SPP config: empty pooling window")
        for ox in range(ow):
            w0, w1 = _window_bounds(ox, sw, pw, kw, W)
            if w1 <= w0:
                raise ValueError("degenerate SPP config: empty pooling window")


def _pick_block_nc(nc_pad, h, w, itemsize):
    """Largest lane-dense (multiple-of-128) divisor of the padded N*C axis s.t.
      * one input tile (H*W*block_nc) stays under ~12 MiB (double-buffered by
        the pipeline; total kept well inside the 48 MiB vmem limit / v7x VMEM),
      * one window-row slab (W, block_nc) plus the running max stays well
        inside the 64 x 4 KiB vreg file (no spills in the max chain),
      * the grid has >= 2 steps whenever padded N*C >= 256 (v7x megacore).
    Falls back to the SMALLEST lane-dense divisor when nothing fits."""
    per_buf_budget = 12 * 1024 * 1024
    vreg_budget = 128 * 1024
    divisors = [d for d in range(128, nc_pad + 1, 128) if nc_pad % d == 0]
    if nc_pad >= 256:
        capped = [d for d in divisors if d < nc_pad]
        if capped:
            divisors = capped
    fitting = [d for d in divisors
               if h * w * d * itemsize <= per_buf_budget
               and (w + 1) * d * itemsize <= vreg_budget]
    if fitting:
        return max(fitting)
    return min(divisors)


def _make_spp_kernel(params, H, W):
    """Kernel over one (H, W, block_nc) tile -> (total_bins, block_nc) tile."""

    def kernel(x_ref, o_ref):
        bin_idx = 0
        for (kh, kw, sh, sw, ph, pw, out_h, out_w) in params:
            for oy in range(out_h):
                h0, h1 = _window_bounds(oy, sh, ph, kh, H)
                for ox in range(out_w):
                    w0, w1 = _window_bounds(ox, sw, pw, kw, W)
                    # Per H-row: small XLU reduce over the window width to a
                    # single (1, block_nc) row, then fold into the running max
                    # on the VPU.  The live set stays ~2 rows of block_nc.
                    acc = jnp.max(x_ref[h0, w0:w1, :], axis=0, keepdims=True)
                    for h in range(h0 + 1, h1):
                        row = jnp.max(x_ref[h, w0:w1, :], axis=0,
                                      keepdims=True)
                        acc = jnp.maximum(acc, row)
                    # Lane-dense store straight into this bin's output slot.
                    o_ref[bin_idx:bin_idx + 1, :] = acc
                    bin_idx += 1

    return kernel


def spp_layer(x, num_levels, pool_type="max_pool"):
    """Pallas implementation of SPPLayer.forward (max_pool variant)."""
    if pool_type != "max_pool":
        # TODO(synk): avg_pool variant (count_include_pad semantics) not implemented.
        raise NotImplementedError("only max_pool is implemented")

    N, C, H, W = x.shape
    params = _spp_level_params(num_levels, H, W)
    _validate_windows(params, H, W)

    total_bins = sum(p[6] * p[7] for p in params)
    NC = N * C
    NC_pad = ((NC + 127) // 128) * 128
    block_nc = _pick_block_nc(NC_pad, H, W, x.dtype.itemsize)

    # Layout plumbing: put batch*channels on the 128-lane axis, padded to a
    # lane-dense width.  With allow_input_fusion this relayout is fused into
    # the pallas_call's input instead of being a standalone HBM pass.
    xt = jnp.transpose(x, (2, 3, 0, 1)).reshape(H, W, NC)
    if NC_pad != NC:
        xt = jnp.pad(xt, ((0, 0), (0, 0), (0, NC_pad - NC)))

    kernel = _make_spp_kernel(params, H, W)

    out = pl.pallas_call(
        kernel,
        out_shape=jax.ShapeDtypeStruct((total_bins, NC_pad), x.dtype),
        grid=(NC_pad // block_nc,),
        in_specs=[pl.BlockSpec((H, W, block_nc), lambda i: (0, 0, i))],
        out_specs=pl.BlockSpec((total_bins, block_nc), lambda i: (0, i)),
        compiler_params=pltpu.CompilerParams(
            dimension_semantics=("parallel",),
            vmem_limit_bytes=48 << 20,
            allow_input_fusion=[True],
        ),
    )(xt)

    out = out[:, :NC]

    # Restore torch ordering: per level, flatten as (n, c, oy, ox) then concat.
    pieces = []
    off = 0
    for (kh, kw, sh, sw, ph, pw, oh, ow) in params:
        nb = oh * ow
        blk = out[off:off + nb, :].reshape(oh, ow, N, C)
        pieces.append(jnp.transpose(blk, (2, 3, 0, 1)).reshape(N, C * nb))
        off += nb
    return jnp.concatenate(pieces, axis=1)


def _spp_reference(x, num_levels):
    """Pure-JAX reference (explicit -inf padding + reduce_window)."""
    N, C, H, W = x.shape
    params = _spp_level_params(num_levels, H, W)
    pieces = []
    for kh, kw, sh, sw, ph, pw, out_h, out_w in params:
        xp = jnp.pad(
            x,
            ((0, 0), (0, 0), (ph, ph), (pw, pw)),
            mode="constant",
            constant_values=-jnp.inf,
        )
        pooled = jax.lax.reduce_window(
            xp,
            -jnp.inf,
            jax.lax.max,
            window_dimensions=(1, 1, kh, kw),
            window_strides=(1, 1, sh, sw),
            padding="VALID",
        )
        pieces.append(pooled.reshape(N, -1))
    return jnp.concatenate(pieces, axis=1)


if __name__ == "__main__":
    key = jax.random.PRNGKey(0)
    N, C, H, W = 2, 4, 16, 16
    num_levels = 3
    x = jax.random.normal(key, (N, C, H, W), dtype=jnp.float32)

    out = spp_layer(x, num_levels)
    out = jax.block_until_ready(out)

    ref = _spp_reference(x, num_levels)
    expected_cols = C * sum((lvl + 1) ** 2 for lvl in range(num_levels))  # C*(1+4+9)
    assert out.shape == (N, expected_cols), out.shape
    assert jnp.allclose(out, ref, atol=1e-6), "mismatch vs reference"

    print("KERNEL_OK")
</pallas_src>

<mosaic_0001>
module attributes {stable_mosaic.version = 11 : i64} {
  func.func @kernel(%arg0: i32, %arg1: memref<16x16x128xf32, #tpu.memory_space<vmem>>, %arg2: memref<14x128xf32, #tpu.memory_space<vmem>>) attributes {dimension_semantics = [#tpu.dimension_semantics<parallel>], iteration_bounds = array<i64: 1>, scalar_prefetch = 0 : i64, scratch_operands = 0 : i64, tpu.core_type = #tpu.core_type<tc>, window_params = [{transform_indices = @transform_0, window_bounds = array<i64: 16, 16, 128>}, {transform_indices = @transform_1, window_bounds = array<i64: 14, 128>}]} {
    %c0 = arith.constant 0 : index
    %c0_0 = arith.constant 0 : index
    %c0_1 = arith.constant 0 : index
    %0 = vector.load %arg1[%c0, %c0_0, %c0_1] : memref<16x16x128xf32, #tpu.memory_space<vmem>>, vector<1x16x128xf32>
    %1 = vector.shape_cast %0 : vector<1x16x128xf32> to vector<16x128xf32>
    %cst = arith.constant dense<0xFF800000> : vector<128xf32>
    %2 = vector.multi_reduction <maximumf>, %1, %cst [0] : vector<16x128xf32> to vector<128xf32>
    %3 = vector.shape_cast %2 : vector<128xf32> to vector<1x128xf32>
    %c1 = arith.constant 1 : index
    %c0_2 = arith.constant 0 : index
    %c0_3 = arith.constant 0 : index
    %4 = vector.load %arg1[%c1, %c0_2, %c0_3] : memref<16x16x128xf32, #tpu.memory_space<vmem>>, vector<1x16x128xf32>
    %5 = vector.shape_cast %4 : vector<1x16x128xf32> to vector<16x128xf32>
    %cst_4 = arith.constant dense<0xFF800000> : vector<128xf32>
    %6 = vector.multi_reduction <maximumf>, %5, %cst_4 [0] : vector<16x128xf32> to vector<128xf32>
    %7 = vector.shape_cast %6 : vector<128xf32> to vector<1x128xf32>
    %8 = arith.maximumf %3, %7 : vector<1x128xf32>
    %c2 = arith.constant 2 : index
    %c0_5 = arith.constant 0 : index
    %c0_6 = arith.constant 0 : index
    %9 = vector.load %arg1[%c2, %c0_5, %c0_6] : memref<16x16x128xf32, #tpu.memory_space<vmem>>, vector<1x16x128xf32>
    %10 = vector.shape_cast %9 : vector<1x16x128xf32> to vector<16x128xf32>
    %cst_7 = arith.constant dense<0xFF800000> : vector<128xf32>
    %11 = vector.multi_reduction <maximumf>, %10, %cst_7 [0] : vector<16x128xf32> to vector<128xf32>
    %12 = vector.shape_cast %11 : vector<128xf32> to vector<1x128xf32>
    %13 = arith.maximumf %8, %12 : vector<1x128xf32>
    %c3 = arith.constant 3 : index
    %c0_8 = arith.constant 0 : index
    %c0_9 = arith.constant 0 : index
    %14 = vector.load %arg1[%c3, %c0_8, %c0_9] : memref<16x16x128xf32, #tpu.memory_space<vmem>>, vector<1x16x128xf32>
    %15 = vector.shape_cast %14 : vector<1x16x128xf32> to vector<16x128xf32>
    %cst_10 = arith.constant dense<0xFF800000> : vector<128xf32>
    %16 = vector.multi_reduction <maximumf>, %15, %cst_10 [0] : vector<16x128xf32> to vector<128xf32>
    %17 = vector.shape_cast %16 : vector<128xf32> to vector<1x128xf32>
    %18 = arith.maximumf %13, %17 : vector<1x128xf32>
    %c4 = arith.constant 4 : index
    %c0_11 = arith.constant 0 : index
    %c0_12 = arith.constant 0 : index
    %19 = vector.load %arg1[%c4, %c0_11, %c0_12] : memref<16x16x128xf32, #tpu.memory_space<vmem>>, vector<1x16x128xf32>
    %20 = vector.shape_cast %19 : vector<1x16x128xf32> to vector<16x128xf32>
    %cst_13 = arith.constant dense<0xFF800000> : vector<128xf32>
    %21 = vector.multi_reduction <maximumf>, %20, %cst_13 [0] : vector<16x128xf32> to vector<128xf32>
    %22 = vector.shape_cast %21 : vector<128xf32> to vector<1x128xf32>
    %23 = arith.maximumf %18, %22 : vector<1x128xf32>
    %c5 = arith.constant 5 : index
    %c0_14 = arith.constant 0 : index
    %c0_15 = arith.constant 0 : index
    %24 = vector.load %arg1[%c5, %c0_14, %c0_15] : memref<16x16x128xf32, #tpu.memory_space<vmem>>, vector<1x16x128xf32>
    %25 = vector.shape_cast %24 : vector<1x16x128xf32> to vector<16x128xf32>
    %cst_16 = arith.constant dense<0xFF800000> : vector<128xf32>
    %26 = vector.multi_reduction <maximumf>, %25, %cst_16 [0] : vector<16x128xf32> to vector<128xf32>
    %27 = vector.shape_cast %26 : vector<128xf32> to vector<1x128xf32>
    %28 = arith.maximumf %23, %27 : vector<1x128xf32>
    %c6 = arith.constant 6 : index
    %c0_17 = arith.constant 0 : index
    %c0_18 = arith.constant 0 : index
    %29 = vector.load %arg1[%c6, %c0_17, %c0_18] : memref<16x16x128xf32, #tpu.memory_space<vmem>>, vector<1x16x128xf32>
    %30 = vector.shape_cast %29 : vector<1x16x128xf32> to vector<16x128xf32>
    %cst_19 = arith.constant dense<0xFF800000> : vector<128xf32>
    %31 = vector.multi_reduction <maximumf>, %30, %cst_19 [0] : vector<16x128xf32> to vector<128xf32>
    %32 = vector.shape_cast %31 : vector<128xf32> to vector<1x128xf32>
    %33 = arith.maximumf %28, %32 : vector<1x128xf32>
    %c7 = arith.constant 7 : index
    %c0_20 = arith.constant 0 : index
    %c0_21 = arith.constant 0 : index
    %34 = vector.load %arg1[%c7, %c0_20, %c0_21] : memref<16x16x128xf32, #tpu.memory_space<vmem>>, vector<1x16x128xf32>
    %35 = vector.shape_cast %34 : vector<1x16x128xf32> to vector<16x128xf32>
    %cst_22 = arith.constant dense<0xFF800000> : vector<128xf32>
    %36 = vector.multi_reduction <maximumf>, %35, %cst_22 [0] : vector<16x128xf32> to vector<128xf32>
    %37 = vector.shape_cast %36 : vector<128xf32> to vector<1x128xf32>
    %38 = arith.maximumf %33, %37 : vector<1x128xf32>
    %c8 = arith.constant 8 : index
    %c0_23 = arith.constant 0 : index
    %c0_24 = arith.constant 0 : index
    %39 = vector.load %arg1[%c8, %c0_23, %c0_24] : memref<16x16x128xf32, #tpu.memory_space<vmem>>, vector<1x16x128xf32>
    %40 = vector.shape_cast %39 : vector<1x16x128xf32> to vector<16x128xf32>
    %cst_25 = arith.constant dense<0xFF800000> : vector<128xf32>
    %41 = vector.multi_reduction <maximumf>, %40, %cst_25 [0] : vector<16x128xf32> to vector<128xf32>
    %42 = vector.shape_cast %41 : vector<128xf32> to vector<1x128xf32>
    %43 = arith.maximumf %38, %42 : vector<1x128xf32>
    %c9 = arith.constant 9 : index
    %c0_26 = arith.constant 0 : index
    %c0_27 = arith.constant 0 : index
    %44 = vector.load %arg1[%c9, %c0_26, %c0_27] : memref<16x16x128xf32, #tpu.memory_space<vmem>>, vector<1x16x128xf32>
    %45 = vector.shape_cast %44 : vector<1x16x128xf32> to vector<16x128xf32>
    %cst_28 = arith.constant dense<0xFF800000> : vector<128xf32>
    %46 = vector.multi_reduction <maximumf>, %45, %cst_28 [0] : vector<16x128xf32> to vector<128xf32>
    %47 = vector.shape_cast %46 : vector<128xf32> to vector<1x128xf32>
    %48 = arith.maximumf %43, %47 : vector<1x128xf32>
    %c10 = arith.constant 10 : index
    %c0_29 = arith.constant 0 : index
    %c0_30 = arith.constant 0 : index
    %49 = vector.load %arg1[%c10, %c0_29, %c0_30] : memref<16x16x128xf32, #tpu.memory_space<vmem>>, vector<1x16x128xf32>
    %50 = vector.shape_cast %49 : vector<1x16x128xf32> to vector<16x128xf32>
    %cst_31 = arith.constant dense<0xFF800000> : vector<128xf32>
    %51 = vector.multi_reduction <maximumf>, %50, %cst_31 [0] : vector<16x128xf32> to vector<128xf32>
    %52 = vector.shape_cast %51 : vector<128xf32> to vector<1x128xf32>
    %53 = arith.maximumf %48, %52 : vector<1x128xf32>
    %c11 = arith.constant 11 : index
    %c0_32 = arith.constant 0 : index
    %c0_33 = arith.constant 0 : index
    %54 = vector.load %arg1[%c11, %c0_32, %c0_33] : memref<16x16x128xf32, #tpu.memory_space<vmem>>, vector<1x16x128xf32>
    %55 = vector.shape_cast %54 : vector<1x16x128xf32> to vector<16x128xf32>
    %cst_34 = arith.constant dense<0xFF800000> : vector<128xf32>
    %56 = vector.multi_reduction <maximumf>, %55, %cst_34 [0] : vector<16x128xf32> to vector<128xf32>
    %57 = vector.shape_cast %56 : vector<128xf32> to vector<1x128xf32>
    %58 = arith.maximumf %53, %57 : vector<1x128xf32>
    %c12 = arith.constant 12 : index
    %c0_35 = arith.constant 0 : index
    %c0_36 = arith.constant 0 : index
    %59 = vector.load %arg1[%c12, %c0_35, %c0_36] : memref<16x16x128xf32, #tpu.memory_space<vmem>>, vector<1x16x128xf32>
    %60 = vector.shape_cast %59 : vector<1x16x128xf32> to vector<16x128xf32>
    %cst_37 = arith.constant dense<0xFF800000> : vector<128xf32>
    %61 = vector.multi_reduction <maximumf>, %60, %cst_37 [0] : vector<16x128xf32> to vector<128xf32>
    %62 = vector.shape_cast %61 : vector<128xf32> to vector<1x128xf32>
    %63 = arith.maximumf %58, %62 : vector<1x128xf32>
    %c13 = arith.constant 13 : index
    %c0_38 = arith.constant 0 : index
    %c0_39 = arith.constant 0 : index
    %64 = vector.load %arg1[%c13, %c0_38, %c0_39] : memref<16x16x128xf32, #tpu.memory_space<vmem>>, vector<1x16x128xf32>
    %65 = vector.shape_cast %64 : vector<1x16x128xf32> to vector<16x128xf32>
    %cst_40 = arith.constant dense<0xFF800000> : vector<128xf32>
    %66 = vector.multi_reduction <maximumf>, %65, %cst_40 [0] : vector<16x128xf32> to vector<128xf32>
    %67 = vector.shape_cast %66 : vector<128xf32> to vector<1x128xf32>
    %68 = arith.maximumf %63, %67 : vector<1x128xf32>
    %c14 = arith.constant 14 : index
    %c0_41 = arith.constant 0 : index
    %c0_42 = arith.constant 0 : index
    %69 = vector.load %arg1[%c14, %c0_41, %c0_42] : memref<16x16x128xf32, #tpu.memory_space<vmem>>, vector<1x16x128xf32>
    %70 = vector.shape_cast %69 : vector<1x16x128xf32> to vector<16x128xf32>
    %cst_43 = arith.constant dense<0xFF800000> : vector<128xf32>
    %71 = vector.multi_reduction <maximumf>, %70, %cst_43 [0] : vector<16x128xf32> to vector<128xf32>
    %72 = vector.shape_cast %71 : vector<128xf32> to vector<1x128xf32>
    %73 = arith.maximumf %68, %72 : vector<1x128xf32>
    %c15 = arith.constant 15 : index
    %c0_44 = arith.constant 0 : index
    %c0_45 = arith.constant 0 : index
    %74 = vector.load %arg1[%c15, %c0_44, %c0_45] : memref<16x16x128xf32, #tpu.memory_space<vmem>>, vector<1x16x128xf32>
    %75 = vector.shape_cast %74 : vector<1x16x128xf32> to vector<16x128xf32>
    %cst_46 = arith.constant dense<0xFF800000> : vector<128xf32>
    %76 = vector.multi_reduction <maximumf>, %75, %cst_46 [0] : vector<16x128xf32> to vector<128xf32>
    %77 = vector.shape_cast %76 : vector<128xf32> to vector<1x128xf32>
    %78 = arith.maximumf %73, %77 : vector<1x128xf32>
    %c0_47 = arith.constant 0 : index
    %c0_48 = arith.constant 0 : index
    %79 = vector.load %arg2[%c0_47, %c0_48] : memref<14x128xf32, #tpu.memory_space<vmem>>, vector<1x128xf32>
    tpu.vector_store %arg2[%c0_47, %c0_48], %78 {strides = array<i32>} : memref<14x128xf32, #tpu.memory_space<vmem>>, vector<1x128xf32>,
    %c0_49 = arith.constant 0 : index
    %c0_50 = arith.constant 0 : index
    %c0_51 = arith.constant 0 : index
    %80 = vector.load %arg1[%c0_49, %c0_50, %c0_51] : memref<16x16x128xf32, #tpu.memory_space<vmem>>, vector<1x8x128xf32>
    %81 = vector.shape_cast %80 : vector<1x8x128xf32> to vector<8x128xf32>
    %cst_52 = arith.constant dense<0xFF800000> : vector<128xf32>
    %82 = vector.multi_reduction <maximumf>, %81, %cst_52 [0] : vector<8x128xf32> to vector<128xf32>
    %83 = vector.shape_cast %82 : vector<128xf32> to vector<1x128xf32>
    %c1_53 = arith.constant 1 : index
    %c0_54 = arith.constant 0 : index
    %c0_55 = arith.constant 0 : index
    %84 = vector.load %arg1[%c1_53, %c0_54, %c0_55] : memref<16x16x128xf32, #tpu.memory_space<vmem>>, vector<1x8x128xf32>
    %85 = vector.shape_cast %84 : vector<1x8x128xf32> to vector<8x128xf32>
    %cst_56 = arith.constant dense<0xFF800000> : vector<128xf32>
    %86 = vector.multi_reduction <maximumf>, %85, %cst_56 [0] : vector<8x128xf32> to vector<128xf32>
    %87 = vector.shape_cast %86 : vector<128xf32> to vector<1x128xf32>
    %88 = arith.maximumf %83, %87 : vector<1x128xf32>
    %c2_57 = arith.constant 2 : index
    %c0_58 = arith.constant 0 : index
    %c0_59 = arith.constant 0 : index
    %89 = vector.load %arg1[%c2_57, %c0_58, %c0_59] : memref<16x16x128xf32, #tpu.memory_space<vmem>>, vector<1x8x128xf32>
    %90 = vector.shape_cast %89 : vector<1x8x128xf32> to vector<8x128xf32>
    %cst_60 = arith.constant dense<0xFF800000> : vector<128xf32>
    %91 = vector.multi_reduction <maximumf>, %90, %cst_60 [0] : vector<8x128xf32> to vector<128xf32>
    %92 = vector.shape_cast %91 : vector<128xf32> to vector<1x128xf32>
    %93 = arith.maximumf %88, %92 : vector<1x128xf32>
    %c3_61 = arith.constant 3 : index
    %c0_62 = arith.constant 0 : index
    %c0_63 = arith.constant 0 : index
    %94 = vector.load %arg1[%c3_61, %c0_62, %c0_63] : memref<16x16x128xf32, #tpu.memory_space<vmem>>, vector<1x8x128xf32>
    %95 = vector.shape_cast %94 : vector<1x8x128xf32> to vector<8x128xf32>
    %cst_64 = arith.constant dense<0xFF800000> : vector<128xf32>
    %96 = vector.multi_reduction <maximumf>, %95, %cst_64 [0] : vector<8x128xf32> to vector<128xf32>
    %97 = vector.shape_cast %96 : vector<128xf32> to vector<1x128xf32>
    %98 = arith.maximumf %93, %97 : vector<1x128xf32>
    %c4_65 = arith.constant 4 : index
    %c0_66 = arith.constant 0 : index
    %c0_67 = arith.constant 0 : index
    %99 = vector.load %arg1[%c4_65, %c0_66, %c0_67] : memref<16x16x128xf32, #tpu.memory_space<vmem>>, vector<1x8x128xf32>
    %100 = vector.shape_cast %99 : vector<1x8x128xf32> to vector<8x128xf32>
    %cst_68 = arith.constant dense<0xFF800000> : vector<128xf32>
    %101 = vector.multi_reduction <maximumf>, %100, %cst_68 [0] : vector<8x128xf32> to vector<128xf32>
    %102 = vector.shape_cast %101 : vector<128xf32> to vector<1x128xf32>
    %103 = arith.maximumf %98, %102 : vector<1x128xf32>
    %c5_69 = arith.constant 5 : index
    %c0_70 = arith.constant 0 : index
    %c0_71 = arith.constant 0 : index
    %104 = vector.load %arg1[%c5_69, %c0_70, %c0_71] : memref<16x16x128xf32, #tpu.memory_space<vmem>>, vector<1x8x128xf32>
    %105 = vector.shape_cast %104 : vector<1x8x128xf32> to vector<8x128xf32>
    %cst_72 = arith.constant dense<0xFF800000> : vector<128xf32>
    %106 = vector.multi_reduction <maximumf>, %105, %cst_72 [0] : vector<8x128xf32> to vector<128xf32>
    %107 = vector.shape_cast %106 : vector<128xf32> to vector<1x128xf32>
    %108 = arith.maximumf %103, %107 : vector<1x128xf32>
    %c6_73 = arith.constant 6 : index
    %c0_74 = arith.constant 0 : index
    %c0_75 = arith.constant 0 : index
    %109 = vector.load %arg1[%c6_73, %c0_74, %c0_75] : memref<16x16x128xf32, #tpu.memory_space<vmem>>, vector<1x8x128xf32>
    %110 = vector.shape_cast %109 : vector<1x8x128xf32> to vector<8x128xf32>
    %cst_76 = arith.constant dense<0xFF800000> : vector<128xf32>
    %111 = vector.multi_reduction <maximumf>, %110, %cst_76 [0] : vector<8x128xf32> to vector<128xf32>
    %112 = vector.shape_cast %111 : vector<128xf32> to vector<1x128xf32>
    %113 = arith.maximumf %108, %112 : vector<1x128xf32>
    %c7_77 = arith.constant 7 : index
    %c0_78 = arith.constant 0 : index
    %c0_79 = arith.constant 0 : index
    %114 = vector.load %arg1[%c7_77, %c0_78, %c0_79] : memref<16x16x128xf32, #tpu.memory_space<vmem>>, vector<1x8x128xf32>
    %115 = vector.shape_cast %114 : vector<1x8x128xf32> to vector<8x128xf32>
    %cst_80 = arith.constant dense<0xFF800000> : vector<128xf32>
    %116 = vector.multi_reduction <maximumf>, %115, %cst_80 [0] : vector<8x128xf32> to vector<128xf32>
    %117 = vector.shape_cast %116 : vector<128xf32> to vector<1x128xf32>
    %118 = arith.maximumf %113, %117 : vector<1x128xf32>
    %c1_81 = arith.constant 1 : index
    %c0_82 = arith.constant 0 : index
    %119 = vector.load %arg2[%c1_81, %c0_82] : memref<14x128xf32, #tpu.memory_space<vmem>>, vector<1x128xf32>
    tpu.vector_store %arg2[%c1_81, %c0_82], %118 {strides = array<i32>} : memref<14x128xf32, #tpu.memory_space<vmem>>, vector<1x128xf32>,
    %c0_83 = arith.constant 0 : index
    %c8_84 = arith.constant 8 : index
    %c0_85 = arith.constant 0 : index
    %120 = vector.load %arg1[%c0_83, %c8_84, %c0_85] : memref<16x16x128xf32, #tpu.memory_space<vmem>>, vector<1x8x128xf32>
    %121 = vector.shape_cast %120 : vector<1x8x128xf32> to vector<8x128xf32>
    %cst_86 = arith.constant dense<0xFF800000> : vector<128xf32>
    %122 = vector.multi_reduction <maximumf>, %121, %cst_86 [0] : vector<8x128xf32> to vector<128xf32>
    %123 = vector.shape_cast %122 : vector<128xf32> to vector<1x128xf32>
    %c1_87 = arith.constant 1 : index
    %c8_88 = arith.constant 8 : index
    %c0_89 = arith.constant 0 : index
    %124 = vector.load %arg1[%c1_87, %c8_88, %c0_89] : memref<16x16x128xf32, #tpu.memory_space<vmem>>, vector<1x8x128xf32>
    %125 = vector.shape_cast %124 : vector<1x8x128xf32> to vector<8x128xf32>
    %cst_90 = arith.constant dense<0xFF800000> : vector<128xf32>
    %126 = vector.multi_reduction <maximumf>, %125, %cst_90 [0] : vector<8x128xf32> to vector<128xf32>
    %127 = vector.shape_cast %126 : vector<128xf32> to vector<1x128xf32>
    %128 = arith.maximumf %123, %127 : vector<1x128xf32>
    %c2_91 = arith.constant 2 : index
    %c8_92 = arith.constant 8 : index
    %c0_93 = arith.constant 0 : index
    %129 = vector.load %arg1[%c2_91, %c8_92, %c0_93] : memref<16x16x128xf32, #tpu.memory_space<vmem>>, vector<1x8x128xf32>
    %130 = vector.shape_cast %129 : vector<1x8x128xf32> to vector<8x128xf32>
    %cst_94 = arith.constant dense<0xFF800000> : vector<128xf32>
    %131 = vector.multi_reduction <maximumf>, %130, %cst_94 [0] : vector<8x128xf32> to vector<128xf32>
    %132 = vector.shape_cast %131 : vector<128xf32> to vector<1x128xf32>
    %133 = arith.maximumf %128, %132 : vector<1x128xf32>
    %c3_95 = arith.constant 3 : index
    %c8_96 = arith.constant 8 : index
    %c0_97 = arith.constant 0 : index
    %134 = vector.load %arg1[%c3_95, %c8_96, %c0_97] : memref<16x16x128xf32, #tpu.memory_space<vmem>>, vector<1x8x128xf32>
    %135 = vector.shape_cast %134 : vector<1x8x128xf32> to vector<8x128xf32>
    %cst_98 = arith.constant dense<0xFF800000> : vector<128xf32>
    %136 = vector.multi_reduction <maximumf>, %135, %cst_98 [0] : vector<8x128xf32> to vector<128xf32>
    %137 = vector.shape_cast %136 : vector<128xf32> to vector<1x128xf32>
    %138 = arith.maximumf %133, %137 : vector<1x128xf32>
    %c4_99 = arith.constant 4 : index
    %c8_100 = arith.constant 8 : index
    %c0_101 = arith.constant 0 : index
    %139 = vector.load %arg1[%c4_99, %c8_100, %c0_101] : memref<16x16x128xf32, #tpu.memory_space<vmem>>, vector<1x8x128xf32>
    %140 = vector.shape_cast %139 : vector<1x8x128xf32> to vector<8x128xf32>
    %cst_102 = arith.constant dense<0xFF800000> : vector<128xf32>
    %141 = vector.multi_reduction <maximumf>, %140, %cst_102 [0] : vector<8x128xf32> to vector<128xf32>
    %142 = vector.shape_cast %141 : vector<128xf32> to vector<1x128xf32>
    %143 = arith.maximumf %138, %142 : vector<1x128xf32>
    %c5_103 = arith.constant 5 : index
    %c8_104 = arith.constant 8 : index
    %c0_105 = arith.constant 0 : index
    %144 = vector.load %arg1[%c5_103, %c8_104, %c0_105] : memref<16x16x128xf32, #tpu.memory_space<vmem>>, vector<1x8x128xf32>
    %145 = vector.shape_cast %144 : vector<1x8x128xf32> to vector<8x128xf32>
    %cst_106 = arith.constant dense<0xFF800000> : vector<128xf32>
    %146 = vector.multi_reduction <maximumf>, %145, %cst_106 [0] : vector<8x128xf32> to vector<128xf32>
    %147 = vector.shape_cast %146 : vector<128xf32> to vector<1x128xf32>
    %148 = arith.maximumf %143, %147 : vector<1x128xf32>
    %c6_107 = arith.constant 6 : index
    %c8_108 = arith.constant 8 : index
    %c0_109 = arith.constant 0 : index
    %149 = vector.load %arg1[%c6_107, %c8_108, %c0_109] : memref<16x16x128xf32, #tpu.memory_space<vmem>>, vector<1x8x128xf32>
    %150 = vector.shape_cast %149 : vector<1x8x128xf32> to vector<8x128xf32>
    %cst_110 = arith.constant dense<0xFF800000> : vector<128xf32>
    %151 = vector.multi_reduction <maximumf>, %150, %cst_110 [0] : vector<8x128xf32> to vector<128xf32>
    %152 = vector.shape_cast %151 : vector<128xf32> to vector<1x128xf32>
    %153 = arith.maximumf %148, %152 : vector<1x128xf32>
    %c7_111 = arith.constant 7 : index
    %c8_112 = arith.constant 8 : index
    %c0_113 = arith.constant 0 : index
    %154 = vector.load %arg1[%c7_111, %c8_112, %c0_113] : memref<16x16x128xf32, #tpu.memory_space<vmem>>, vector<1x8x128xf32>
    %155 = vector.shape_cast %154 : vector<1x8x128xf32> to vector<8x128xf32>
    %cst_114 = arith.constant dense<0xFF800000> : vector<128xf32>
    %156 = vector.multi_reduction <maximumf>, %155, %cst_114 [0] : vector<8x128xf32> to vector<128xf32>
    %157 = vector.shape_cast %156 : vector<128xf32> to vector<1x128xf32>
    %158 = arith.maximumf %153, %157 : vector<1x128xf32>
    %c2_115 = arith.constant 2 : index
    %c0_116 = arith.constant 0 : index
    %159 = vector.load %arg2[%c2_115, %c0_116] : memref<14x128xf32, #tpu.memory_space<vmem>>, vector<1x128xf32>
    tpu.vector_store %arg2[%c2_115, %c0_116], %158 {strides = array<i32>} : memref<14x128xf32, #tpu.memory_space<vmem>>, vector<1x128xf32>,
    %c8_117 = arith.constant 8 : index
    %c0_118 = arith.constant 0 : index
    %c0_119 = arith.constant 0 : index
    %160 = vector.load %arg1[%c8_117, %c0_118, %c0_119] : memref<16x16x128xf32, #tpu.memory_space<vmem>>, vector<1x8x128xf32>
    %161 = vector.shape_cast %160 : vector<1x8x128xf32> to vector<8x128xf32>
    %cst_120 = arith.constant dense<0xFF800000> : vector<128xf32>
    %162 = vector.multi_reduction <maximumf>, %161, %cst_120 [0] : vector<8x128xf32> to vector<128xf32>
    %163 = vector.shape_cast %162 : vector<128xf32> to vector<1x128xf32>
    %c9_121 = arith.constant 9 : index
    %c0_122 = arith.constant 0 : index
    %c0_123 = arith.constant 0 : index
    %164 = vector.load %arg1[%c9_121, %c0_122, %c0_123] : memref<16x16x128xf32, #tpu.memory_space<vmem>>, vector<1x8x128xf32>
    %165 = vector.shape_cast %164 : vector<1x8x128xf32> to vector<8x128xf32>
    %cst_124 = arith.constant dense<0xFF800000> : vector<128xf32>
    %166 = vector.multi_reduction <maximumf>, %165, %cst_124 [0] : vector<8x128xf32> to vector<128xf32>
    %167 = vector.shape_cast %166 : vector<128xf32> to vector<1x128xf32>
    %168 = arith.maximumf %163, %167 : vector<1x128xf32>
    %c10_125 = arith.constant 10 : index
    %c0_126 = arith.constant 0 : index
    %c0_127 = arith.constant 0 : index
    %169 = vector.load %arg1[%c10_125, %c0_126, %c0_127] : memref<16x16x128xf32, #tpu.memory_space<vmem>>, vector<1x8x128xf32>
    %170 = vector.shape_cast %169 : vector<1x8x128xf32> to vector<8x128xf32>
    %cst_128 = arith.constant dense<0xFF800000> : vector<128xf32>
    %171 = vector.multi_reduction <maximumf>, %170, %cst_128 [0] : vector<8x128xf32> to vector<128xf32>
    %172 = vector.shape_cast %171 : vector<128xf32> to vector<1x128xf32>
    %173 = arith.maximumf %168, %172 : vector<1x128xf32>
    %c11_129 = arith.constant 11 : index
    %c0_130 = arith.constant 0 : index
    %c0_131 = arith.constant 0 : index
    %174 = vector.load %arg1[%c11_129, %c0_130, %c0_131] : memref<16x16x128xf32, #tpu.memory_space<vmem>>, vector<1x8x128xf32>
    %175 = vector.shape_cast %174 : vector<1x8x128xf32> to vector<8x128xf32>
    %cst_132 = arith.constant dense<0xFF800000> : vector<128xf32>
    %176 = vector.multi_reduction <maximumf>, %175, %cst_132 [0] : vector<8x128xf32> to vector<128xf32>
    %177 = vector.shape_cast %176 : vector<128xf32> to vector<1x128xf32>
    %178 = arith.maximumf %173, %177 : vector<1x128xf32>
    %c12_133 = arith.constant 12 : index
    %c0_134 = arith.constant 0 : index
    %c0_135 = arith.constant 0 : index
    %179 = vector.load %arg1[%c12_133, %c0_134, %c0_135] : memref<16x16x128xf32, #tpu.memory_space<vmem>>, vector<1x8x128xf32>
    %180 = vector.shape_cast %179 : vector<1x8x128xf32> to vector<8x128xf32>
    %cst_136 = arith.constant dense<0xFF800000> : vector<128xf32>
    %181 = vector.multi_reduction <maximumf>, %180, %cst_136 [0] : vector<8x128xf32> to vector<128xf32>
    %182 = vector.shape_cast %181 : vector<128xf32> to vector<1x128xf32>
    %183 = arith.maximumf %178, %182 : vector<1x128xf32>
    %c13_137 = arith.constant 13 : index
    %c0_138 = arith.constant 0 : index
    %c0_139 = arith.constant 0 : index
    %184 = vector.load %arg1[%c13_137, %c0_138, %c0_139] : memref<16x16x128xf32, #tpu.memory_space<vmem>>, vector<1x8x128xf32>
    %185 = vector.shape_cast %184 : vector<1x8x128xf32> to vector<8x128xf32>
    %cst_140 = arith.constant dense<0xFF800000> : vector<128xf32>
    %186 = vector.multi_reduction <maximumf>, %185, %cst_140 [0] : vector<8x128xf32> to vector<128xf32>
    %187 = vector.shape_cast %186 : vector<128xf32> to vector<1x128xf32>
    %188 = arith.maximumf %183, %187 : vector<1x128xf32>
    %c14_141 = arith.constant 14 : index
    %c0_142 = arith.constant 0 : index
    %c0_143 = arith.constant 0 : index
    %189 = vector.load %arg1[%c14_141, %c0_142, %c0_143] : memref<16x16x128xf32, #tpu.memory_space<vmem>>, vector<1x8x128xf32>
    %190 = vector.shape_cast %189 : vector<1x8x128xf32> to vector<8x128xf32>
    %cst_144 = arith.constant dense<0xFF800000> : vector<128xf32>
    %191 = vector.multi_reduction <maximumf>, %190, %cst_144 [0] : vector<8x128xf32> to vector<128xf32>
    %192 = vector.shape_cast %191 : vector<128xf32> to vector<1x128xf32>
    %193 = arith.maximumf %188, %192 : vector<1x128xf32>
    %c15_145 = arith.constant 15 : index
    %c0_146 = arith.constant 0 : index
    %c0_147 = arith.constant 0 : index
    %194 = vector.load %arg1[%c15_145, %c0_146, %c0_147] : memref<16x16x128xf32, #tpu.memory_space<vmem>>, vector<1x8x128xf32>
    %195 = vector.shape_cast %194 : vector<1x8x128xf32> to vector<8x128xf32>
    %cst_148 = arith.constant dense<0xFF800000> : vector<128xf32>
    %196 = vector.multi_reduction <maximumf>, %195, %cst_148 [0] : vector<8x128xf32> to vector<128xf32>
    %197 = vector.shape_cast %196 : vector<128xf32> to vector<1x128xf32>
    %198 = arith.maximumf %193, %197 : vector<1x128xf32>
    %c3_149 = arith.constant 3 : index
    %c0_150 = arith.constant 0 : index
    %199 = vector.load %arg2[%c3_149, %c0_150] : memref<14x128xf32, #tpu.memory_space<vmem>>, vector<1x128xf32>
    tpu.vector_store %arg2[%c3_149, %c0_150], %198 {strides = array<i32>} : memref<14x128xf32, #tpu.memory_space<vmem>>, vector<1x128xf32>,
    %c8_151 = arith.constant 8 : index
    %c8_152 = arith.constant 8 : index
    %c0_153 = arith.constant 0 : index
    %200 = vector.load %arg1[%c8_151, %c8_152, %c0_153] : memref<16x16x128xf32, #tpu.memory_space<vmem>>, vector<1x8x128xf32>
    %201 = vector.shape_cast %200 : vector<1x8x128xf32> to vector<8x128xf32>
    %cst_154 = arith.constant dense<0xFF800000> : vector<128xf32>
    %202 = vector.multi_reduction <maximumf>, %201, %cst_154 [0] : vector<8x128xf32> to vector<128xf32>
    %203 = vector.shape_cast %202 : vector<128xf32> to vector<1x128xf32>
    %c9_155 = arith.constant 9 : index
    %c8_156 = arith.constant 8 : index
    %c0_157 = arith.constant 0 : index
    %204 = vector.load %arg1[%c9_155, %c8_156, %c0_157] : memref<16x16x128xf32, #tpu.memory_space<vmem>>, vector<1x8x128xf32>
    %205 = vector.shape_cast %204 : vector<1x8x128xf32> to vector<8x128xf32>
    %cst_158 = arith.constant dense<0xFF800000> : vector<128xf32>
    %206 = vector.multi_reduction <maximumf>, %205, %cst_158 [0] : vector<8x128xf32> to vector<128xf32>
    %207 = vector.shape_cast %206 : vector<128xf32> to vector<1x128xf32>
    %208 = arith.maximumf %203, %207 : vector<1x128xf32>
    %c10_159 = arith.constant 10 : index
    %c8_160 = arith.constant 8 : index
    %c0_161 = arith.constant 0 : index
    %209 = vector.load %arg1[%c10_159, %c8_160, %c0_161] : memref<16x16x128xf32, #tpu.memory_space<vmem>>, vector<1x8x128xf32>
    %210 = vector.shape_cast %209 : vector<1x8x128xf32> to vector<8x128xf32>
    %cst_162 = arith.constant dense<0xFF800000> : vector<128xf32>
    %211 = vector.multi_reduction <maximumf>, %210, %cst_162 [0] : vector<8x128xf32> to vector<128xf32>
    %212 = vector.shape_cast %211 : vector<128xf32> to vector<1x128xf32>
    %213 = arith.maximumf %208, %212 : vector<1x128xf32>
    %c11_163 = arith.constant 11 : index
    %c8_164 = arith.constant 8 : index
    %c0_165 = arith.constant 0 : index
    %214 = vector.load %arg1[%c11_163, %c8_164, %c0_165] : memref<16x16x128xf32, #tpu.memory_space<vmem>>, vector<1x8x128xf32>
    %215 = vector.shape_cast %214 : vector<1x8x128xf32> to vector<8x128xf32>
    %cst_166 = arith.constant dense<0xFF800000> : vector<128xf32>
    %216 = vector.multi_reduction <maximumf>, %215, %cst_166 [0] : vector<8x128xf32> to vector<128xf32>
    %217 = vector.shape_cast %216 : vector<128xf32> to vector<1x128xf32>
    %218 = arith.maximumf %213, %217 : vector<1x128xf32>
    %c12_167 = arith.constant 12 : index
    %c8_168 = arith.constant 8 : index
    %c0_169 = arith.constant 0 : index
    %219 = vector.load %arg1[%c12_167, %c8_168, %c0_169] : memref<16x16x128xf32, #tpu.memory_space<vmem>>, vector<1x8x128xf32>
    %220 = vector.shape_cast %219 : vector<1x8x128xf32> to vector<8x128xf32>
    %cst_170 = arith.constant dense<0xFF800000> : vector<128xf32>
    %221 = vector.multi_reduction <maximumf>, %220, %cst_170 [0] : vector<8x128xf32> to vector<128xf32>
    %222 = vector.shape_cast %221 : vector<128xf32> to vector<1x128xf32>
    %223 = arith.maximumf %218, %222 : vector<1x128xf32>
    %c13_171 = arith.constant 13 : index
    %c8_172 = arith.constant 8 : index
    %c0_173 = arith.constant 0 : index
    %224 = vector.load %arg1[%c13_171, %c8_172, %c0_173] : memref<16x16x128xf32, #tpu.memory_space<vmem>>, vector<1x8x128xf32>
    %225 = vector.shape_cast %224 : vector<1x8x128xf32> to vector<8x128xf32>
    %cst_174 = arith.constant dense<0xFF800000> : vector<128xf32>
    %226 = vector.multi_reduction <maximumf>, %225, %cst_174 [0] : vector<8x128xf32> to vector<128xf32>
    %227 = vector.shape_cast %226 : vector<128xf32> to vector<1x128xf32>
    %228 = arith.maximumf %223, %227 : vector<1x128xf32>
    %c14_175 = arith.constant 14 : index
    %c8_176 = arith.constant 8 : index
    %c0_177 = arith.constant 0 : index
    %229 = vector.load %arg1[%c14_175, %c8_176, %c0_177] : memref<16x16x128xf32, #tpu.memory_space<vmem>>, vector<1x8x128xf32>
    %230 = vector.shape_cast %229 : vector<1x8x128xf32> to vector<8x128xf32>
    %cst_178 = arith.constant dense<0xFF800000> : vector<128xf32>
    %231 = vector.multi_reduction <maximumf>, %230, %cst_178 [0] : vector<8x128xf32> to vector<128xf32>
    %232 = vector.shape_cast %231 : vector<128xf32> to vector<1x128xf32>
    %233 = arith.maximumf %228, %232 : vector<1x128xf32>
    %c15_179 = arith.constant 15 : index
    %c8_180 = arith.constant 8 : index
    %c0_181 = arith.constant 0 : index
    %234 = vector.load %arg1[%c15_179, %c8_180, %c0_181] : memref<16x16x128xf32, #tpu.memory_space<vmem>>, vector<1x8x128xf32>
    %235 = vector.shape_cast %234 : vector<1x8x128xf32> to vector<8x128xf32>
    %cst_182 = arith.constant dense<0xFF800000> : vector<128xf32>
    %236 = vector.multi_reduction <maximumf>, %235, %cst_182 [0] : vector<8x128xf32> to vector<128xf32>
    %237 = vector.shape_cast %236 : vector<128xf32> to vector<1x128xf32>
    %238 = arith.maximumf %233, %237 : vector<1x128xf32>
    %c4_183 = arith.constant 4 : index
    %c0_184 = arith.constant 0 : index
    %239 = vector.load %arg2[%c4_183, %c0_184] : memref<14x128xf32, #tpu.memory_space<vmem>>, vector<1x128xf32>
    tpu.vector_store %arg2[%c4_183, %c0_184], %238 {strides = array<i32>} : memref<14x128xf32, #tpu.memory_space<vmem>>, vector<1x128xf32>,
    %c0_185 = arith.constant 0 : index
    %c0_186 = arith.constant 0 : index
    %c0_187 = arith.constant 0 : index
    %240 = vector.load %arg1[%c0_185, %c0_186, %c0_187] : memref<16x16x128xf32, #tpu.memory_space<vmem>>, vector<1x5x128xf32>
    %241 = vector.shape_cast %240 : vector<1x5x128xf32> to vector<5x128xf32>
    %cst_188 = arith.constant dense<0xFF800000> : vector<128xf32>
    %242 = vector.multi_reduction <maximumf>, %241, %cst_188 [0] : vector<5x128xf32> to vector<128xf32>
    %243 = vector.shape_cast %242 : vector<128xf32> to vector<1x128xf32>
    %c1_189 = arith.constant 1 : index
    %c0_190 = arith.constant 0 : index
    %c0_191 = arith.constant 0 : index
    %244 = vector.load %arg1[%c1_189, %c0_190, %c0_191] : memref<16x16x128xf32, #tpu.memory_space<vmem>>, vector<1x5x128xf32>
    %245 = vector.shape_cast %244 : vector<1x5x128xf32> to vector<5x128xf32>
    %cst_192 = arith.constant dense<0xFF800000> : vector<128xf32>
    %246 = vector.multi_reduction <maximumf>, %245, %cst_192 [0] : vector<5x128xf32> to vector<128xf32>
    %247 = vector.shape_cast %246 : vector<128xf32> to vector<1x128xf32>
    %248 = arith.maximumf %243, %247 : vector<1x128xf32>
    %c2_193 = arith.constant 2 : index
    %c0_194 = arith.constant 0 : index
    %c0_195 = arith.constant 0 : index
    %249 = vector.load %arg1[%c2_193, %c0_194, %c0_195] : memref<16x16x128xf32, #tpu.memory_space<vmem>>, vector<1x5x128xf32>
    %250 = vector.shape_cast %249 : vector<1x5x128xf32> to vector<5x128xf32>
    %cst_196 = arith.constant dense<0xFF800000> : vector<128xf32>
    %251 = vector.multi_reduction <maximumf>, %250, %cst_196 [0] : vector<5x128xf32> to vector<128xf32>
    %252 = vector.shape_cast %251 : vector<128xf32> to vector<1x128xf32>
    %253 = arith.maximumf %248, %252 : vector<1x128xf32>
    %c3_197 = arith.constant 3 : index
    %c0_198 = arith.constant 0 : index
    %c0_199 = arith.constant 0 : index
    %254 = vector.load %arg1[%c3_197, %c0_198, %c0_199] : memref<16x16x128xf32, #tpu.memory_space<vmem>>, vector<1x5x128xf32>
    %255 = vector.shape_cast %254 : vector<1x5x128xf32> to vector<5x128xf32>
    %cst_200 = arith.constant dense<0xFF800000> : vector<128xf32>
    %256 = vector.multi_reduction <maximumf>, %255, %cst_200 [0] : vector<5x128xf32> to vector<128xf32>
    %257 = vector.shape_cast %256 : vector<128xf32> to vector<1x128xf32>
    %258 = arith.maximumf %253, %257 : vector<1x128xf32>
    %c4_201 = arith.constant 4 : index
    %c0_202 = arith.constant 0 : index
    %c0_203 = arith.constant 0 : index
    %259 = vector.load %arg1[%c4_201, %c0_202, %c0_203] : memref<16x16x128xf32, #tpu.memory_space<vmem>>, vector<1x5x128xf32>
    %260 = vector.shape_cast %259 : vector<1x5x128xf32> to vector<5x128xf32>
    %cst_204 = arith.constant dense<0xFF800000> : vector<128xf32>
    %261 = vector.multi_reduction <maximumf>, %260, %cst_204 [0] : vector<5x128xf32> to vector<128xf32>
    %262 = vector.shape_cast %261 : vector<128xf32> to vector<1x128xf32>
    %263 = arith.maximumf %258, %262 : vector<1x128xf32>
    %c5_205 = arith.constant 5 : index
    %c0_206 = arith.constant 0 : index
    %264 = vector.load %arg2[%c5_205, %c0_206] : memref<14x128xf32, #tpu.memory_space<vmem>>, vector<1x128xf32>
    tpu.vector_store %arg2[%c5_205, %c0_206], %263 {strides = array<i32>} : memref<14x128xf32, #tpu.memory_space<vmem>>, vector<1x128xf32>,
    %c0_207 = arith.constant 0 : index
    %c5_208 = arith.constant 5 : index
    %c0_209 = arith.constant 0 : index
    %265 = vector.load %arg1[%c0_207, %c5_208, %c0_209] : memref<16x16x128xf32, #tpu.memory_space<vmem>>, vector<1x6x128xf32>
    %266 = vector.shape_cast %265 : vector<1x6x128xf32> to vector<6x128xf32>
    %cst_210 = arith.constant dense<0xFF800000> : vector<128xf32>
    %267 = vector.multi_reduction <maximumf>, %266, %cst_210 [0] : vector<6x128xf32> to vector<128xf32>
    %268 = vector.shape_cast %267 : vector<128xf32> to vector<1x128xf32>
    %c1_211 = arith.constant 1 : index
    %c5_212 = arith.constant 5 : index
    %c0_213 = arith.constant 0 : index
    %269 = vector.load %arg1[%c1_211, %c5_212, %c0_213] : memref<16x16x128xf32, #tpu.memory_space<vmem>>, vector<1x6x128xf32>
    %270 = vector.shape_cast %269 : vector<1x6x128xf32> to vector<6x128xf32>
    %cst_214 = arith.constant dense<0xFF800000> : vector<128xf32>
    %271 = vector.multi_reduction <maximumf>, %270, %cst_214 [0] : vector<6x128xf32> to vector<128xf32>
    %272 = vector.shape_cast %271 : vector<128xf32> to vector<1x128xf32>
    %273 = arith.maximumf %268, %272 : vector<1x128xf32>
    %c2_215 = arith.constant 2 : index
    %c5_216 = arith.constant 5 : index
    %c0_217 = arith.constant 0 : index
    %274 = vector.load %arg1[%c2_215, %c5_216, %c0_217] : memref<16x16x128xf32, #tpu.memory_space<vmem>>, vector<1x6x128xf32>
    %275 = vector.shape_cast %274 : vector<1x6x128xf32> to vector<6x128xf32>
    %cst_218 = arith.constant dense<0xFF800000> : vector<128xf32>
    %276 = vector.multi_reduction <maximumf>, %275, %cst_218 [0] : vector<6x128xf32> to vector<128xf32>
    %277 = vector.shape_cast %276 : vector<128xf32> to vector<1x128xf32>
    %278 = arith.maximumf %273, %277 : vector<1x128xf32>
    %c3_219 = arith.constant 3 : index
    %c5_220 = arith.constant 5 : index
    %c0_221 = arith.constant 0 : index
    %279 = vector.load %arg1[%c3_219, %c5_220, %c0_221] : memref<16x16x128xf32, #tpu.memory_space<vmem>>, vector<1x6x128xf32>
    %280 = vector.shape_cast %279 : vector<1x6x128xf32> to vector<6x128xf32>
    %cst_222 = arith.constant dense<0xFF800000> : vector<128xf32>
    %281 = vector.multi_reduction <maximumf>, %280, %cst_222 [0] : vector<6x128xf32> to vector<128xf32>
    %282 = vector.shape_cast %281 : vector<128xf32> to vector<1x128xf32>
    %283 = arith.maximumf %278, %282 : vector<1x128xf32>
    %c4_223 = arith.constant 4 : index
    %c5_224 = arith.constant 5 : index
    %c0_225 = arith.constant 0 : index
    %284 = vector.load %arg1[%c4_223, %c5_224, %c0_225] : memref<16x16x128xf32, #tpu.memory_space<vmem>>, vector<1x6x128xf32>
    %285 = vector.shape_cast %284 : vector<1x6x128xf32> to vector<6x128xf32>
    %cst_226 = arith.constant dense<0xFF800000> : vector<128xf32>
    %286 = vector.multi_reduction <maximumf>, %285, %cst_226 [0] : vector<6x128xf32> to vector<128xf32>
    %287 = vector.shape_cast %286 : vector<128xf32> to vector<1x128xf32>
    %288 = arith.maximumf %283, %287 : vector<1x128xf32>
    %c6_227 = arith.constant 6 : index
    %c0_228 = arith.constant 0 : index
    %289 = vector.load %arg2[%c6_227, %c0_228] : memref<14x128xf32, #tpu.memory_space<vmem>>, vector<1x128xf32>
    tpu.vector_store %arg2[%c6_227, %c0_228], %288 {strides = array<i32>} : memref<14x128xf32, #tpu.memory_space<vmem>>, vector<1x128xf32>,
    %c0_229 = arith.constant 0 : index
    %c11_230 = arith.constant 11 : index
    %c0_231 = arith.constant 0 : index
    %290 = vector.load %arg1[%c0_229, %c11_230, %c0_231] : memref<16x16x128xf32, #tpu.memory_space<vmem>>, vector<1x5x128xf32>
    %291 = vector.shape_cast %290 : vector<1x5x128xf32> to vector<5x128xf32>
    %cst_232 = arith.constant dense<0xFF800000> : vector<128xf32>
    %292 = vector.multi_reduction <maximumf>, %291, %cst_232 [0] : vector<5x128xf32> to vector<128xf32>
    %293 = vector.shape_cast %292 : vector<128xf32> to vector<1x128xf32>
    %c1_233 = arith.constant 1 : index
    %c11_234 = arith.constant 11 : index
    %c0_235 = arith.constant 0 : index
    %294 = vector.load %arg1[%c1_233, %c11_234, %c0_235] : memref<16x16x128xf32, #tpu.memory_space<vmem>>, vector<1x5x128xf32>
    %295 = vector.shape_cast %294 : vector<1x5x128xf32> to vector<5x128xf32>
    %cst_236 = arith.constant dense<0xFF800000> : vector<128xf32>
    %296 = vector.multi_reduction <maximumf>, %295, %cst_236 [0] : vector<5x128xf32> to vector<128xf32>
    %297 = vector.shape_cast %296 : vector<128xf32> to vector<1x128xf32>
    %298 = arith.maximumf %293, %297 : vector<1x128xf32>
    %c2_237 = arith.constant 2 : index
    %c11_238 = arith.constant 11 : index
    %c0_239 = arith.constant 0 : index
    %299 = vector.load %arg1[%c2_237, %c11_238, %c0_239] : memref<16x16x128xf32, #tpu.memory_space<vmem>>, vector<1x5x128xf32>
    %300 = vector.shape_cast %299 : vector<1x5x128xf32> to vector<5x128xf32>
    %cst_240 = arith.constant dense<0xFF800000> : vector<128xf32>
    %301 = vector.multi_reduction <maximumf>, %300, %cst_240 [0] : vector<5x128xf32> to vector<128xf32>
    %302 = vector.shape_cast %301 : vector<128xf32> to vector<1x128xf32>
    %303 = arith.maximumf %298, %302 : vector<1x128xf32>
    %c3_241 = arith.constant 3 : index
    %c11_242 = arith.constant 11 : index
    %c0_243 = arith.constant 0 : index
    %304 = vector.load %arg1[%c3_241, %c11_242, %c0_243] : memref<16x16x128xf32, #tpu.memory_space<vmem>>, vector<1x5x128xf32>
    %305 = vector.shape_cast %304 : vector<1x5x128xf32> to vector<5x128xf32>
    %cst_244 = arith.constant dense<0xFF800000> : vector<128xf32>
    %306 = vector.multi_reduction <maximumf>, %305, %cst_244 [0] : vector<5x128xf32> to vector<128xf32>
    %307 = vector.shape_cast %306 : vector<128xf32> to vector<1x128xf32>
    %308 = arith.maximumf %303, %307 : vector<1x128xf32>
    %c4_245 = arith.constant 4 : index
    %c11_246 = arith.constant 11 : index
    %c0_247 = arith.constant 0 : index
    %309 = vector.load %arg1[%c4_245, %c11_246, %c0_247] : memref<16x16x128xf32, #tpu.memory_space<vmem>>, vector<1x5x128xf32>
    %310 = vector.shape_cast %309 : vector<1x5x128xf32> to vector<5x128xf32>
    %cst_248 = arith.constant dense<0xFF800000> : vector<128xf32>
    %311 = vector.multi_reduction <maximumf>, %310, %cst_248 [0] : vector<5x128xf32> to vector<128xf32>
    %312 = vector.shape_cast %311 : vector<128xf32> to vector<1x128xf32>
    %313 = arith.maximumf %308, %312 : vector<1x128xf32>
    %c7_249 = arith.constant 7 : index
    %c0_250 = arith.constant 0 : index
    %314 = vector.load %arg2[%c7_249, %c0_250] : memref<14x128xf32, #tpu.memory_space<vmem>>, vector<1x128xf32>
    tpu.vector_store %arg2[%c7_249, %c0_250], %313 {strides = array<i32>} : memref<14x128xf32, #tpu.memory_space<vmem>>, vector<1x128xf32>,
    %c5_251 = arith.constant 5 : index
    %c0_252 = arith.constant 0 : index
    %c0_253 = arith.constant 0 : index
    %315 = vector.load %arg1[%c5_251, %c0_252, %c0_253] : memref<16x16x128xf32, #tpu.memory_space<vmem>>, vector<1x5x128xf32>
    %316 = vector.shape_cast %315 : vector<1x5x128xf32> to vector<5x128xf32>
    %cst_254 = arith.constant dense<0xFF800000> : vector<128xf32>
    %317 = vector.multi_reduction <maximumf>, %316, %cst_254 [0] : vector<5x128xf32> to vector<128xf32>
    %318 = vector.shape_cast %317 : vector<128xf32> to vector<1x128xf32>
    %c6_255 = arith.constant 6 : index
    %c0_256 = arith.constant 0 : index
    %c0_257 = arith.constant 0 : index
    %319 = vector.load %arg1[%c6_255, %c0_256, %c0_257] : memref<16x16x128xf32, #tpu.memory_space<vmem>>, vector<1x5x128xf32>
    %320 = vector.shape_cast %319 : vector<1x5x128xf32> to vector<5x128xf32>
    %cst_258 = arith.constant dense<0xFF800000> : vector<128xf32>
    %321 = vector.multi_reduction <maximumf>, %320, %cst_258 [0] : vector<5x128xf32> to vector<128xf32>
    %322 = vector.shape_cast %321 : vector<128xf32> to vector<1x128xf32>
    %323 = arith.maximumf %318, %322 : vector<1x128xf32>
    %c7_259 = arith.constant 7 : index
    %c0_260 = arith.constant 0 : index
    %c0_261 = arith.constant 0 : index
    %324 = vector.load %arg1[%c7_259, %c0_260, %c0_261] : memref<16x16x128xf32, #tpu.memory_space<vmem>>, vector<1x5x128xf32>
    %325 = vector.shape_cast %324 : vector<1x5x128xf32> to vector<5x128xf32>
    %cst_262 = arith.constant dense<0xFF800000> : vector<128xf32>
    %326 = vector.multi_reduction <maximumf>, %325, %cst_262 [0] : vector<5x128xf32> to vector<128xf32>
    %327 = vector.shape_cast %326 : vector<128xf32> to vector<1x128xf32>
    %328 = arith.maximumf %323, %327 : vector<1x128xf32>
    %c8_263 = arith.constant 8 : index
    %c0_264 = arith.constant 0 : index
    %c0_265 = arith.constant 0 : index
    %329 = vector.load %arg1[%c8_263, %c0_264, %c0_265] : memref<16x16x128xf32, #tpu.memory_space<vmem>>, vector<1x5x128xf32>
    %330 = vector.shape_cast %329 : vector<1x5x128xf32> to vector<5x128xf32>
    %cst_266 = arith.constant dense<0xFF800000> : vector<128xf32>
    %331 = vector.multi_reduction <maximumf>, %330, %cst_266 [0] : vector<5x128xf32> to vector<128xf32>
    %332 = vector.shape_cast %331 : vector<128xf32> to vector<1x128xf32>
    %333 = arith.maximumf %328, %332 : vector<1x128xf32>
    %c9_267 = arith.constant 9 : index
    %c0_268 = arith.constant 0 : index
    %c0_269 = arith.constant 0 : index
    %334 = vector.load %arg1[%c9_267, %c0_268, %c0_269] : memref<16x16x128xf32, #tpu.memory_space<vmem>>, vector<1x5x128xf32>
    %335 = vector.shape_cast %334 : vector<1x5x128xf32> to vector<5x128xf32>
    %cst_270 = arith.constant dense<0xFF800000> : vector<128xf32>
    %336 = vector.multi_reduction <maximumf>, %335, %cst_270 [0] : vector<5x128xf32> to vector<128xf32>
    %337 = vector.shape_cast %336 : vector<128xf32> to vector<1x128xf32>
    %338 = arith.maximumf %333, %337 : vector<1x128xf32>
    %c10_271 = arith.constant 10 : index
    %c0_272 = arith.constant 0 : index
    %c0_273 = arith.constant 0 : index
    %339 = vector.load %arg1[%c10_271, %c0_272, %c0_273] : memref<16x16x128xf32, #tpu.memory_space<vmem>>, vector<1x5x128xf32>
    %340 = vector.shape_cast %339 : vector<1x5x128xf32> to vector<5x128xf32>
    %cst_274 = arith.constant dense<0xFF800000> : vector<128xf32>
    %341 = vector.multi_reduction <maximumf>, %340, %cst_274 [0] : vector<5x128xf32> to vector<128xf32>
    %342 = vector.shape_cast %341 : vector<128xf32> to vector<1x128xf32>
    %343 = arith.maximumf %338, %342 : vector<1x128xf32>
    %c8_275 = arith.constant 8 : index
    %c0_276 = arith.constant 0 : index
    %344 = vector.load %arg2[%c8_275, %c0_276] : memref<14x128xf32, #tpu.memory_space<vmem>>, vector<1x128xf32>
    tpu.vector_store %arg2[%c8_275, %c0_276], %343 {strides = array<i32>} : memref<14x128xf32, #tpu.memory_space<vmem>>, vector<1x128xf32>,
    %c5_277 = arith.constant 5 : index
    %c5_278 = arith.constant 5 : index
    %c0_279 = arith.constant 0 : index
    %345 = vector.load %arg1[%c5_277, %c5_278, %c0_279] : memref<16x16x128xf32, #tpu.memory_space<vmem>>, vector<1x6x128xf32>
    %346 = vector.shape_cast %345 : vector<1x6x128xf32> to vector<6x128xf32>
    %cst_280 = arith.constant dense<0xFF800000> : vector<128xf32>
    %347 = vector.multi_reduction <maximumf>, %346, %cst_280 [0] : vector<6x128xf32> to vector<128xf32>
    %348 = vector.shape_cast %347 : vector<128xf32> to vector<1x128xf32>
    %c6_281 = arith.constant 6 : index
    %c5_282 = arith.constant 5 : index
    %c0_283 = arith.constant 0 : index
    %349 = vector.load %arg1[%c6_281, %c5_282, %c0_283] : memref<16x16x128xf32, #tpu.memory_space<vmem>>, vector<1x6x128xf32>
    %350 = vector.shape_cast %349 : vector<1x6x128xf32> to vector<6x128xf32>
    %cst_284 = arith.constant dense<0xFF800000> : vector<128xf32>
    %351 = vector.multi_reduction <maximumf>, %350, %cst_284 [0] : vector<6x128xf32> to vector<128xf32>
    %352 = vector.shape_cast %351 : vector<128xf32> to vector<1x128xf32>
    %353 = arith.maximumf %348, %352 : vector<1x128xf32>
    %c7_285 = arith.constant 7 : index
    %c5_286 = arith.constant 5 : index
    %c0_287 = arith.constant 0 : index
    %354 = vector.load %arg1[%c7_285, %c5_286, %c0_287] : memref<16x16x128xf32, #tpu.memory_space<vmem>>, vector<1x6x128xf32>
    %355 = vector.shape_cast %354 : vector<1x6x128xf32> to vector<6x128xf32>
    %cst_288 = arith.constant dense<0xFF800000> : vector<128xf32>
    %356 = vector.multi_reduction <maximumf>, %355, %cst_288 [0] : vector<6x128xf32> to vector<128xf32>
    %357 = vector.shape_cast %356 : vector<128xf32> to vector<1x128xf32>
    %358 = arith.maximumf %353, %357 : vector<1x128xf32>
    %c8_289 = arith.constant 8 : index
    %c5_290 = arith.constant 5 : index
    %c0_291 = arith.constant 0 : index
    %359 = vector.load %arg1[%c8_289, %c5_290, %c0_291] : memref<16x16x128xf32, #tpu.memory_space<vmem>>, vector<1x6x128xf32>
    %360 = vector.shape_cast %359 : vector<1x6x128xf32> to vector<6x128xf32>
    %cst_292 = arith.constant dense<0xFF800000> : vector<128xf32>
    %361 = vector.multi_reduction <maximumf>, %360, %cst_292 [0] : vector<6x128xf32> to vector<128xf32>
    %362 = vector.shape_cast %361 : vector<128xf32> to vector<1x128xf32>
    %363 = arith.maximumf %358, %362 : vector<1x128xf32>
    %c9_293 = arith.constant 9 : index
    %c5_294 = arith.constant 5 : index
    %c0_295 = arith.constant 0 : index
    %364 = vector.load %arg1[%c9_293, %c5_294, %c0_295] : memref<16x16x128xf32, #tpu.memory_space<vmem>>, vector<1x6x128xf32>
    %365 = vector.shape_cast %364 : vector<1x6x128xf32> to vector<6x128xf32>
    %cst_296 = arith.constant dense<0xFF800000> : vector<128xf32>
    %366 = vector.multi_reduction <maximumf>, %365, %cst_296 [0] : vector<6x128xf32> to vector<128xf32>
    %367 = vector.shape_cast %366 : vector<128xf32> to vector<1x128xf32>
    %368 = arith.maximumf %363, %367 : vector<1x128xf32>
    %c10_297 = arith.constant 10 : index
    %c5_298 = arith.constant 5 : index
    %c0_299 = arith.constant 0 : index
    %369 = vector.load %arg1[%c10_297, %c5_298, %c0_299] : memref<16x16x128xf32, #tpu.memory_space<vmem>>, vector<1x6x128xf32>
    %370 = vector.shape_cast %369 : vector<1x6x128xf32> to vector<6x128xf32>
    %cst_300 = arith.constant dense<0xFF800000> : vector<128xf32>
    %371 = vector.multi_reduction <maximumf>, %370, %cst_300 [0] : vector<6x128xf32> to vector<128xf32>
    %372 = vector.shape_cast %371 : vector<128xf32> to vector<1x128xf32>
    %373 = arith.maximumf %368, %372 : vector<1x128xf32>
    %c9_301 = arith.constant 9 : index
    %c0_302 = arith.constant 0 : index
    %374 = vector.load %arg2[%c9_301, %c0_302] : memref<14x128xf32, #tpu.memory_space<vmem>>, vector<1x128xf32>
    tpu.vector_store %arg2[%c9_301, %c0_302], %373 {strides = array<i32>} : memref<14x128xf32, #tpu.memory_space<vmem>>, vector<1x128xf32>,
    %c5_303 = arith.constant 5 : index
    %c11_304 = arith.constant 11 : index
    %c0_305 = arith.constant 0 : index
    %375 = vector.load %arg1[%c5_303, %c11_304, %c0_305] : memref<16x16x128xf32, #tpu.memory_space<vmem>>, vector<1x5x128xf32>
    %376 = vector.shape_cast %375 : vector<1x5x128xf32> to vector<5x128xf32>
    %cst_306 = arith.constant dense<0xFF800000> : vector<128xf32>
    %377 = vector.multi_reduction <maximumf>, %376, %cst_306 [0] : vector<5x128xf32> to vector<128xf32>
    %378 = vector.shape_cast %377 : vector<128xf32> to vector<1x128xf32>
    %c6_307 = arith.constant 6 : index
    %c11_308 = arith.constant 11 : index
    %c0_309 = arith.constant 0 : index
    %379 = vector.load %arg1[%c6_307, %c11_308, %c0_309] : memref<16x16x128xf32, #tpu.memory_space<vmem>>, vector<1x5x128xf32>
    %380 = vector.shape_cast %379 : vector<1x5x128xf32> to vector<5x128xf32>
    %cst_310 = arith.constant dense<0xFF800000> : vector<128xf32>
    %381 = vector.multi_reduction <maximumf>, %380, %cst_310 [0] : vector<5x128xf32> to vector<128xf32>
    %382 = vector.shape_cast %381 : vector<128xf32> to vector<1x128xf32>
    %383 = arith.maximumf %378, %382 : vector<1x128xf32>
    %c7_311 = arith.constant 7 : index
    %c11_312 = arith.constant 11 : index
    %c0_313 = arith.constant 0 : index
    %384 = vector.load %arg1[%c7_311, %c11_312, %c0_313] : memref<16x16x128xf32, #tpu.memory_space<vmem>>, vector<1x5x128xf32>
    %385 = vector.shape_cast %384 : vector<1x5x128xf32> to vector<5x128xf32>
    %cst_314 = arith.constant dense<0xFF800000> : vector<128xf32>
    %386 = vector.multi_reduction <maximumf>, %385, %cst_314 [0] : vector<5x128xf32> to vector<128xf32>
    %387 = vector.shape_cast %386 : vector<128xf32> to vector<1x128xf32>
    %388 = arith.maximumf %383, %387 : vector<1x128xf32>
    %c8_315 = arith.constant 8 : index
    %c11_316 = arith.constant 11 : index
    %c0_317 = arith.constant 0 : index
    %389 = vector.load %arg1[%c8_315, %c11_316, %c0_317] : memref<16x16x128xf32, #tpu.memory_space<vmem>>, vector<1x5x128xf32>
    %390 = vector.shape_cast %389 : vector<1x5x128xf32> to vector<5x128xf32>
    %cst_318 = arith.constant dense<0xFF800000> : vector<128xf32>
    %391 = vector.multi_reduction <maximumf>, %390, %cst_318 [0] : vector<5x128xf32> to vector<128xf32>
    %392 = vector.shape_cast %391 : vector<128xf32> to vector<1x128xf32>
    %393 = arith.maximumf %388, %392 : vector<1x128xf32>
    %c9_319 = arith.constant 9 : index
    %c11_320 = arith.constant 11 : index
    %c0_321 = arith.constant 0 : index
    %394 = vector.load %arg1[%c9_319, %c11_320, %c0_321] : memref<16x16x128xf32, #tpu.memory_space<vmem>>, vector<1x5x128xf32>
    %395 = vector.shape_cast %394 : vector<1x5x128xf32> to vector<5x128xf32>
    %cst_322 = arith.constant dense<0xFF800000> : vector<128xf32>
    %396 = vector.multi_reduction <maximumf>, %395, %cst_322 [0] : vector<5x128xf32> to vector<128xf32>
    %397 = vector.shape_cast %396 : vector<128xf32> to vector<1x128xf32>
    %398 = arith.maximumf %393, %397 : vector<1x128xf32>
    %c10_323 = arith.constant 10 : index
    %c11_324 = arith.constant 11 : index
    %c0_325 = arith.constant 0 : index
    %399 = vector.load %arg1[%c10_323, %c11_324, %c0_325] : memref<16x16x128xf32, #tpu.memory_space<vmem>>, vector<1x5x128xf32>
    %400 = vector.shape_cast %399 : vector<1x5x128xf32> to vector<5x128xf32>
    %cst_326 = arith.constant dense<0xFF800000> : vector<128xf32>
    %401 = vector.multi_reduction <maximumf>, %400, %cst_326 [0] : vector<5x128xf32> to vector<128xf32>
    %402 = vector.shape_cast %401 : vector<128xf32> to vector<1x128xf32>
    %403 = arith.maximumf %398, %402 : vector<1x128xf32>
    %c10_327 = arith.constant 10 : index
    %c0_328 = arith.constant 0 : index
    %404 = vector.load %arg2[%c10_327, %c0_328] : memref<14x128xf32, #tpu.memory_space<vmem>>, vector<1x128xf32>
    tpu.vector_store %arg2[%c10_327, %c0_328], %403 {strides = array<i32>} : memref<14x128xf32, #tpu.memory_space<vmem>>, vector<1x128xf32>,
    %c11_329 = arith.constant 11 : index
    %c0_330 = arith.constant 0 : index
    %c0_331 = arith.constant 0 : index
    %405 = vector.load %arg1[%c11_329, %c0_330, %c0_331] : memref<16x16x128xf32, #tpu.memory_space<vmem>>, vector<1x5x128xf32>
    %406 = vector.shape_cast %405 : vector<1x5x128xf32> to vector<5x128xf32>
    %cst_332 = arith.constant dense<0xFF800000> : vector<128xf32>
    %407 = vector.multi_reduction <maximumf>, %406, %cst_332 [0] : vector<5x128xf32> to vector<128xf32>
    %408 = vector.shape_cast %407 : vector<128xf32> to vector<1x128xf32>
    %c12_333 = arith.constant 12 : index
    %c0_334 = arith.constant 0 : index
    %c0_335 = arith.constant 0 : index
    %409 = vector.load %arg1[%c12_333, %c0_334, %c0_335] : memref<16x16x128xf32, #tpu.memory_space<vmem>>, vector<1x5x128xf32>
    %410 = vector.shape_cast %409 : vector<1x5x128xf32> to vector<5x128xf32>
    %cst_336 = arith.constant dense<0xFF800000> : vector<128xf32>
    %411 = vector.multi_reduction <maximumf>, %410, %cst_336 [0] : vector<5x128xf32> to vector<128xf32>
    %412 = vector.shape_cast %411 : vector<128xf32> to vector<1x128xf32>
    %413 = arith.maximumf %408, %412 : vector<1x128xf32>
    %c13_337 = arith.constant 13 : index
    %c0_338 = arith.constant 0 : index
    %c0_339 = arith.constant 0 : index
    %414 = vector.load %arg1[%c13_337, %c0_338, %c0_339] : memref<16x16x128xf32, #tpu.memory_space<vmem>>, vector<1x5x128xf32>
    %415 = vector.shape_cast %414 : vector<1x5x128xf32> to vector<5x128xf32>
    %cst_340 = arith.constant dense<0xFF800000> : vector<128xf32>
    %416 = vector.multi_reduction <maximumf>, %415, %cst_340 [0] : vector<5x128xf32> to vector<128xf32>
    %417 = vector.shape_cast %416 : vector<128xf32> to vector<1x128xf32>
    %418 = arith.maximumf %413, %417 : vector<1x128xf32>
    %c14_341 = arith.constant 14 : index
    %c0_342 = arith.constant 0 : index
    %c0_343 = arith.constant 0 : index
    %419 = vector.load %arg1[%c14_341, %c0_342, %c0_343] : memref<16x16x128xf32, #tpu.memory_space<vmem>>, vector<1x5x128xf32>
    %420 = vector.shape_cast %419 : vector<1x5x128xf32> to vector<5x128xf32>
    %cst_344 = arith.constant dense<0xFF800000> : vector<128xf32>
    %421 = vector.multi_reduction <maximumf>, %420, %cst_344 [0] : vector<5x128xf32> to vector<128xf32>
    %422 = vector.shape_cast %421 : vector<128xf32> to vector<1x128xf32>
    %423 = arith.maximumf %418, %422 : vector<1x128xf32>
    %c15_345 = arith.constant 15 : index
    %c0_346 = arith.constant 0 : index
    %c0_347 = arith.constant 0 : index
    %424 = vector.load %arg1[%c15_345, %c0_346, %c0_347] : memref<16x16x128xf32, #tpu.memory_space<vmem>>, vector<1x5x128xf32>
    %425 = vector.shape_cast %424 : vector<1x5x128xf32> to vector<5x128xf32>
    %cst_348 = arith.constant dense<0xFF800000> : vector<128xf32>
    %426 = vector.multi_reduction <maximumf>, %425, %cst_348 [0] : vector<5x128xf32> to vector<128xf32>
    %427 = vector.shape_cast %426 : vector<128xf32> to vector<1x128xf32>
    %428 = arith.maximumf %423, %427 : vector<1x128xf32>
    %c11_349 = arith.constant 11 : index
    %c0_350 = arith.constant 0 : index
    %429 = vector.load %arg2[%c11_349, %c0_350] : memref<14x128xf32, #tpu.memory_space<vmem>>, vector<1x128xf32>
    tpu.vector_store %arg2[%c11_349, %c0_350], %428 {strides = array<i32>} : memref<14x128xf32, #tpu.memory_space<vmem>>, vector<1x128xf32>,
    %c11_351 = arith.constant 11 : index
    %c5_352 = arith.constant 5 : index
    %c0_353 = arith.constant 0 : index
    %430 = vector.load %arg1[%c11_351, %c5_352, %c0_353] : memref<16x16x128xf32, #tpu.memory_space<vmem>>, vector<1x6x128xf32>
    %431 = vector.shape_cast %430 : vector<1x6x128xf32> to vector<6x128xf32>
    %cst_354 = arith.constant dense<0xFF800000> : vector<128xf32>
    %432 = vector.multi_reduction <maximumf>, %431, %cst_354 [0] : vector<6x128xf32> to vector<128xf32>
    %433 = vector.shape_cast %432 : vector<128xf32> to vector<1x128xf32>
    %c12_355 = arith.constant 12 : index
    %c5_356 = arith.constant 5 : index
    %c0_357 = arith.constant 0 : index
    %434 = vector.load %arg1[%c12_355, %c5_356, %c0_357] : memref<16x16x128xf32, #tpu.memory_space<vmem>>, vector<1x6x128xf32>
    %435 = vector.shape_cast %434 : vector<1x6x128xf32> to vector<6x128xf32>
    %cst_358 = arith.constant dense<0xFF800000> : vector<128xf32>
    %436 = vector.multi_reduction <maximumf>, %435, %cst_358 [0] : vector<6x128xf32> to vector<128xf32>
    %437 = vector.shape_cast %436 : vector<128xf32> to vector<1x128xf32>
    %438 = arith.maximumf %433, %437 : vector<1x128xf32>
    %c13_359 = arith.constant 13 : index
    %c5_360 = arith.constant 5 : index
    %c0_361 = arith.constant 0 : index
    %439 = vector.load %arg1[%c13_359, %c5_360, %c0_361] : memref<16x16x128xf32, #tpu.memory_space<vmem>>, vector<1x6x128xf32>
    %440 = vector.shape_cast %439 : vector<1x6x128xf32> to vector<6x128xf32>
    %cst_362 = arith.constant dense<0xFF800000> : vector<128xf32>
    %441 = vector.multi_reduction <maximumf>, %440, %cst_362 [0] : vector<6x128xf32> to vector<128xf32>
    %442 = vector.shape_cast %441 : vector<128xf32> to vector<1x128xf32>
    %443 = arith.maximumf %438, %442 : vector<1x128xf32>
    %c14_363 = arith.constant 14 : index
    %c5_364 = arith.constant 5 : index
    %c0_365 = arith.constant 0 : index
    %444 = vector.load %arg1[%c14_363, %c5_364, %c0_365] : memref<16x16x128xf32, #tpu.memory_space<vmem>>, vector<1x6x128xf32>
    %445 = vector.shape_cast %444 : vector<1x6x128xf32> to vector<6x128xf32>
    %cst_366 = arith.constant dense<0xFF800000> : vector<128xf32>
    %446 = vector.multi_reduction <maximumf>, %445, %cst_366 [0] : vector<6x128xf32> to vector<128xf32>
    %447 = vector.shape_cast %446 : vector<128xf32> to vector<1x128xf32>
    %448 = arith.maximumf %443, %447 : vector<1x128xf32>
    %c15_367 = arith.constant 15 : index
    %c5_368 = arith.constant 5 : index
    %c0_369 = arith.constant 0 : index
    %449 = vector.load %arg1[%c15_367, %c5_368, %c0_369] : memref<16x16x128xf32, #tpu.memory_space<vmem>>, vector<1x6x128xf32>
    %450 = vector.shape_cast %449 : vector<1x6x128xf32> to vector<6x128xf32>
    %cst_370 = arith.constant dense<0xFF800000> : vector<128xf32>
    %451 = vector.multi_reduction <maximumf>, %450, %cst_370 [0] : vector<6x128xf32> to vector<128xf32>
    %452 = vector.shape_cast %451 : vector<128xf32> to vector<1x128xf32>
    %453 = arith.maximumf %448, %452 : vector<1x128xf32>
    %c12_371 = arith.constant 12 : index
    %c0_372 = arith.constant 0 : index
    %454 = vector.load %arg2[%c12_371, %c0_372] : memref<14x128xf32, #tpu.memory_space<vmem>>, vector<1x128xf32>
    tpu.vector_store %arg2[%c12_371, %c0_372], %453 {strides = array<i32>} : memref<14x128xf32, #tpu.memory_space<vmem>>, vector<1x128xf32>,
    %c11_373 = arith.constant 11 : index
    %c11_374 = arith.constant 11 : index
    %c0_375 = arith.constant 0 : index
    %455 = vector.load %arg1[%c11_373, %c11_374, %c0_375] : memref<16x16x128xf32, #tpu.memory_space<vmem>>, vector<1x5x128xf32>
    %456 = vector.shape_cast %455 : vector<1x5x128xf32> to vector<5x128xf32>
    %cst_376 = arith.constant dense<0xFF800000> : vector<128xf32>
    %457 = vector.multi_reduction <maximumf>, %456, %cst_376 [0] : vector<5x128xf32> to vector<128xf32>
    %458 = vector.shape_cast %457 : vector<128xf32> to vector<1x128xf32>
    %c12_377 = arith.constant 12 : index
    %c11_378 = arith.constant 11 : index
    %c0_379 = arith.constant 0 : index
    %459 = vector.load %arg1[%c12_377, %c11_378, %c0_379] : memref<16x16x128xf32, #tpu.memory_space<vmem>>, vector<1x5x128xf32>
    %460 = vector.shape_cast %459 : vector<1x5x128xf32> to vector<5x128xf32>
    %cst_380 = arith.constant dense<0xFF800000> : vector<128xf32>
    %461 = vector.multi_reduction <maximumf>, %460, %cst_380 [0] : vector<5x128xf32> to vector<128xf32>
    %462 = vector.shape_cast %461 : vector<128xf32> to vector<1x128xf32>
    %463 = arith.maximumf %458, %462 : vector<1x128xf32>
    %c13_381 = arith.constant 13 : index
    %c11_382 = arith.constant 11 : index
    %c0_383 = arith.constant 0 : index
    %464 = vector.load %arg1[%c13_381, %c11_382, %c0_383] : memref<16x16x128xf32, #tpu.memory_space<vmem>>, vector<1x5x128xf32>
    %465 = vector.shape_cast %464 : vector<1x5x128xf32> to vector<5x128xf32>
    %cst_384 = arith.constant dense<0xFF800000> : vector<128xf32>
    %466 = vector.multi_reduction <maximumf>, %465, %cst_384 [0] : vector<5x128xf32> to vector<128xf32>
    %467 = vector.shape_cast %466 : vector<128xf32> to vector<1x128xf32>
    %468 = arith.maximumf %463, %467 : vector<1x128xf32>
    %c14_385 = arith.constant 14 : index
    %c11_386 = arith.constant 11 : index
    %c0_387 = arith.constant 0 : index
    %469 = vector.load %arg1[%c14_385, %c11_386, %c0_387] : memref<16x16x128xf32, #tpu.memory_space<vmem>>, vector<1x5x128xf32>
    %470 = vector.shape_cast %469 : vector<1x5x128xf32> to vector<5x128xf32>
    %cst_388 = arith.constant dense<0xFF800000> : vector<128xf32>
    %471 = vector.multi_reduction <maximumf>, %470, %cst_388 [0] : vector<5x128xf32> to vector<128xf32>
    %472 = vector.shape_cast %471 : vector<128xf32> to vector<1x128xf32>
    %473 = arith.maximumf %468, %472 : vector<1x128xf32>
    %c15_389 = arith.constant 15 : index
    %c11_390 = arith.constant 11 : index
    %c0_391 = arith.constant 0 : index
    %474 = vector.load %arg1[%c15_389, %c11_390, %c0_391] : memref<16x16x128xf32, #tpu.memory_space<vmem>>, vector<1x5x128xf32>
    %475 = vector.shape_cast %474 : vector<1x5x128xf32> to vector<5x128xf32>
    %cst_392 = arith.constant dense<0xFF800000> : vector<128xf32>
    %476 = vector.multi_reduction <maximumf>, %475, %cst_392 [0] : vector<5x128xf32> to vector<128xf32>
    %477 = vector.shape_cast %476 : vector<128xf32> to vector<1x128xf32>
    %478 = arith.maximumf %473, %477 : vector<1x128xf32>
    %c13_393 = arith.constant 13 : index
    %c0_394 = arith.constant 0 : index
    %479 = vector.load %arg2[%c13_393, %c0_394] : memref<14x128xf32, #tpu.memory_space<vmem>>, vector<1x128xf32>
    tpu.vector_store %arg2[%c13_393, %c0_394], %478 {strides = array<i32>} : memref<14x128xf32, #tpu.memory_space<vmem>>, vector<1x128xf32>,
    return
  }
  func.func @transform_0(%arg0: i32) -> (i32, i32, i32) {
    %c0_i32 = arith.constant 0 : i32
    %c0_i32_0 = arith.constant 0 : i32
    %c0_i32_1 = arith.constant 0 : i32
    return %c0_i32, %c0_i32_0, %arg0 : i32, i32, i32
  }
  func.func @transform_1(%arg0: i32) -> (i32, i32) {
    %c0_i32 = arith.constant 0 : i32
    %c0_i32_0 = arith.constant 0 : i32
    return %c0_i32, %arg0 : i32, i32
  }
}

</mosaic_0001>

<llo_original>
// kernel: tpu_custom_call.1
$region0: #{tpu_custom_call.1}
  #allocation0 [shape = 'u32[]', space=smem, size = 0x4, offset = 0x4, fixed_abs, tag = 'smem constant byte address 0x4 - core index']
  #allocation1 [shape = 'u32[144,128]{1,0:T(1,128)}', space=vmem, size = 0x12000, scoped, tag = 'internal scratch']
  %s0 = inlined_call_operand.hbm [shape: f32[16,16,128], index: 0, kind: input, shape index: {}]
  %s1 = inlined_call_operand.hbm [shape: f32[14,128], index: 1, kind: output, shape index: {}]
  %s2 = sld [smem:[#allocation0]]
  $region18: #{tpu_custom_call.1} parent=0
    _
  %s4 = ssub.s32 1, %s2
  %s5 = scalar_select 0, %s4, %s2
  $region1: #{tpu_custom_call.1} parent=0
    #allocation2 [shape = 'u8[131072]{0}', space=vmem, size = 0x20000, scoped, tag = 'input window, operand 0, single buffered']
    #allocation3 [shape = 's32[1]{0}', space=sflag, size = 0x4, scoped, tag = 'scoped memory for tpu_custom_call.1']
    #allocation4 [shape = 's32[1]{0}', space=sflag, size = 0x4, scoped, tag = 'scoped memory for tpu_custom_call.1']
    #allocation5 [shape = 'u8[8192]{0}', space=vmem, size = 0x2000, scoped, tag = 'output window, operand 0, single buffered']
    %6 = vsyncpa [#allocation3], 0
    %7 = vsyncpa [#allocation4], 0
    // Predicated region
    $region2: #{tpu_custom_call.1} parent=1 // pred_check
      _
    $region3: #{tpu_custom_call.1} parent=1 // pred_check_branch
      %9 = sbr.rel (0) target = $region5
    $region4: #{tpu_custom_call.1} parent=1 // pred_region
      %s11 = ssub.s32 4096, 4096
      %12 = vsyncadd [#allocation3], %s11
      %s13 = sshll.u32 [#allocation2], 4
      %s14 = int_to_ptr.vmem [resolvable:$true] %s13
      %19 = dma.hbm_to_vmem [thread:$0]  %s0, 4096, %s14, [#allocation3], 128, 128, 8
    $region5: #{tpu_custom_call.1} parent=1 // pred_fallthru
      _
    // Predicated region
    $region6: #{tpu_custom_call.1} parent=1 // pred_check
      _
    $region7: #{tpu_custom_call.1} parent=1 // pred_check_branch
      %21 = sbr.rel (0) target = $region9
    $region8: #{tpu_custom_call.1} parent=1 // pred_region
      %22 = dma.done [#allocation3], 4096
    $region9: #{tpu_custom_call.1} parent=1 // pred_fallthru
      _
    %v23 = vld [vmem:[#allocation2] sm:$0xff]
    %v24 = vld [vmem:[#allocation2 + $0x8] sm:$0xff]
    %v25 = vmax.f32 %v23, %v24
    %v26 = vrot.slane %v25, 4
    %v27 = vmax.f32 %v25, %v26
    %v28 = vrot.slane %v27, 2
    %v29 = vmax.f32 %v27, %v28
    %v30 = vrot.slane %v29, 1
    %v31 = vmax.f32 %v29, %v30
    %s32 = scalar_lea.vmem [#allocation2], 16
    %v33 = vld [vmem:[%s32] sm:$0xff]
    %v34 = vld [vmem:[%s32 + $0x8] sm:$0xff]
    %v35 = vmax.f32 %v33, %v34
    %v36 = vrot.slane %v35, 4
    %v37 = vmax.f32 %v35, %v36
    %v38 = vrot.slane %v37, 2
    %v39 = vmax.f32 %v37, %v38
    %v40 = vrot.slane %v39, 1
    %v41 = vmax.f32 %v39, %v40
    %v42 = vmax.f32 %v31, %v41
    %s43 = scalar_lea.vmem [#allocation2], 32
    %v44 = vld [vmem:[%s43] sm:$0xff]
    %v45 = vld [vmem:[%s43 + $0x8] sm:$0xff]
    %v46 = vmax.f32 %v44, %v45
    %v47 = vrot.slane %v46, 4
    %v48 = vmax.f32 %v46, %v47
    %v49 = vrot.slane %v48, 2
    %v50 = vmax.f32 %v48, %v49
    %v51 = vrot.slane %v50, 1
    %v52 = vmax.f32 %v50, %v51
    %v53 = vmax.f32 %v42, %v52
    %s54 = scalar_lea.vmem [#allocation2], 48
    %v55 = vld [vmem:[%s54] sm:$0xff]
    %v56 = vld [vmem:[%s54 + $0x8] sm:$0xff]
    %v57 = vmax.f32 %v55, %v56
    %v58 = vrot.slane %v57, 4
    %v59 = vmax.f32 %v57, %v58
    %v60 = vrot.slane %v59, 2
    %v61 = vmax.f32 %v59, %v60
    %v62 = vrot.slane %v61, 1
    %v63 = vmax.f32 %v61, %v62
    %v64 = vmax.f32 %v53, %v63
    %s65 = scalar_lea.vmem [#allocation2], 64
    %v66 = vld [vmem:[%s65] sm:$0xff]
    %v67 = vld [vmem:[%s65 + $0x8] sm:$0xff]
    %v68 = vmax.f32 %v66, %v67
    %v69 = vrot.slane %v68, 4
    %v70 = vmax.f32 %v68, %v69
    %v71 = vrot.slane %v70, 2
    %v72 = vmax.f32 %v70, %v71
    %v73 = vrot.slane %v72, 1
    %v74 = vmax.f32 %v72, %v73
    %v75 = vmax.f32 %v64, %v74
    %s76 = scalar_lea.vmem [#allocation2], 80
    %v77 = vld [vmem:[%s76] sm:$0xff]
    %v78 = vld [vmem:[%s76 + $0x8] sm:$0xff]
    %v79 = vmax.f32 %v77, %v78
    %v80 = vrot.slane %v79, 4
    %v81 = vmax.f32 %v79, %v80
    %v82 = vrot.slane %v81, 2
    %v83 = vmax.f32 %v81, %v82
    %v84 = vrot.slane %v83, 1
    %v85 = vmax.f32 %v83, %v84
    %v86 = vmax.f32 %v75, %v85
    %s87 = scalar_lea.vmem [#allocation2], 96
    %v88 = vld [vmem:[%s87] sm:$0xff]
    %v89 = vld [vmem:[%s87 + $0x8] sm:$0xff]
    %v90 = vmax.f32 %v88, %v89
    %v91 = vrot.slane %v90, 4
    %v92 = vmax.f32 %v90, %v91
    %v93 = vrot.slane %v92, 2
    %v94 = vmax.f32 %v92, %v93
    %v95 = vrot.slane %v94, 1
    %v96 = vmax.f32 %v94, %v95
    %v97 = vmax.f32 %v86, %v96
    %s98 = scalar_lea.vmem [#allocation2], 112
    %v99 = vld [vmem:[%s98] sm:$0xff]
    %v100 = vld [vmem:[%s98 + $0x8] sm:$0xff]
    %v101 = vmax.f32 %v99, %v100
    %v102 = vrot.slane %v101, 4
    %v103 = vmax.f32 %v101, %v102
    %v104 = vrot.slane %v103, 2
    %v105 = vmax.f32 %v103, %v104
    %v106 = vrot.slane %v105, 1
    %v107 = vmax.f32 %v105, %v106
    %v108 = vmax.f32 %v97, %v107
    %s109 = scalar_lea.vmem [#allocation2], 128
    %v110 = vld [vmem:[%s109] sm:$0xff]
    %v111 = vld [vmem:[%s109 + $0x8] sm:$0xff]
    %v112 = vmax.f32 %v110, %v111
    %v113 = vrot.slane %v112, 4
    %v114 = vmax.f32 %v112, %v113
    %v115 = vrot.slane %v114, 2
    %v116 = vmax.f32 %v114, %v115
    %v117 = vrot.slane %v116, 1
    %v118 = vmax.f32 %v116, %v117
    %v119 = vmax.f32 %v108, %v118
    %s120 = scalar_lea.vmem [#allocation2], 144
    %v121 = vld [vmem:[%s120] sm:$0xff]
    %v122 = vld [vmem:[%s120 + $0x8] sm:$0xff]
    %v123 = vmax.f32 %v121, %v122
    %v124 = vrot.slane %v123, 4
    %v125 = vmax.f32 %v123, %v124
    %v126 = vrot.slane %v125, 2
    %v127 = vmax.f32 %v125, %v126
    %v128 = vrot.slane %v127, 1
    %v129 = vmax.f32 %v127, %v128
    %v130 = vmax.f32 %v119, %v129
    %s131 = scalar_lea.vmem [#allocation2], 160
    %v132 = vld [vmem:[%s131] sm:$0xff]
    %v133 = vld [vmem:[%s131 + $0x8] sm:$0xff]
    %v134 = vmax.f32 %v132, %v133
    %v135 = vrot.slane %v134, 4
    %v136 = vmax.f32 %v134, %v135
    %v137 = vrot.slane %v136, 2
    %v138 = vmax.f32 %v136, %v137
    %v139 = vrot.slane %v138, 1
    %v140 = vmax.f32 %v138, %v139
    %v141 = vmax.f32 %v130, %v140
    %s142 = scalar_lea.vmem [#allocation2], 176
    %v143 = vld [vmem:[%s142] sm:$0xff]
    %v144 = vld [vmem:[%s142 + $0x8] sm:$0xff]
    %v145 = vmax.f32 %v143, %v144
    %v146 = vrot.slane %v145, 4
    %v147 = vmax.f32 %v145, %v146
    %v148 = vrot.slane %v147, 2
    %v149 = vmax.f32 %v147, %v148
    %v150 = vrot.slane %v149, 1
    %v151 = vmax.f32 %v149, %v150
    %v152 = vmax.f32 %v141, %v151
    %s153 = scalar_lea.vmem [#allocation2], 192
    %v154 = vld [vmem:[%s153] sm:$0xff]
    %v155 = vld [vmem:[%s153 + $0x8] sm:$0xff]
    %v156 = vmax.f32 %v154, %v155
    %v157 = vrot.slane %v156, 4
    %v158 = vmax.f32 %v156, %v157
    %v159 = vrot.slane %v158, 2
    %v160 = vmax.f32 %v158, %v159
    %v161 = vrot.slane %v160, 1
    %v162 = vmax.f32 %v160, %v161
    %v163 = vmax.f32 %v152, %v162
    %s164 = scalar_lea.vmem [#allocation2], 208
    %v165 = vld [vmem:[%s164] sm:$0xff]
    %v166 = vld [vmem:[%s164 + $0x8] sm:$0xff]
    %v167 = vmax.f32 %v165, %v166
    %v168 = vrot.slane %v167, 4
    %v169 = vmax.f32 %v167, %v168
    %v170 = vrot.slane %v169, 2
    %v171 = vmax.f32 %v169, %v170
    %v172 = vrot.slane %v171, 1
    %v173 = vmax.f32 %v171, %v172
    %v174 = vmax.f32 %v163, %v173
    %s175 = scalar_lea.vmem [#allocation2], 224
    %v176 = vld [vmem:[%s175] sm:$0xff]
    %v177 = vld [vmem:[%s175 + $0x8] sm:$0xff]
    %v178 = vmax.f32 %v176, %v177
    %v179 = vrot.slane %v178, 4
    %v180 = vmax.f32 %v178, %v179
    %v181 = vrot.slane %v180, 2
    %v182 = vmax.f32 %v180, %v181
    %v183 = vrot.slane %v182, 1
    %v184 = vmax.f32 %v182, %v183
    %v185 = vmax.f32 %v174, %v184
    %s186 = scalar_lea.vmem [#allocation2], 240
    %v187 = vld [vmem:[%s186] sm:$0xff]
    %v188 = vld [vmem:[%s186 + $0x8] sm:$0xff]
    %v189 = vmax.f32 %v187, %v188
    %v190 = vrot.slane %v189, 4
    %v191 = vmax.f32 %v189, %v190
    %v192 = vrot.slane %v191, 2
    %v193 = vmax.f32 %v191, %v192
    %v194 = vrot.slane %v193, 1
    %v195 = vmax.f32 %v193, %v194
    %v196 = vmax.f32 %v185, %v195
    %197 = vst [vmem:[#allocation5] sm:$0x1] %v196
    %v198 = vld [vmem:[#allocation2] sm:$0xff]
    %v199 = vrot.slane %v198, 4
    %v200 = vmax.f32 %v198, %v199
    %v201 = vrot.slane %v200, 2
    %v202 = vmax.f32 %v200, %v201
    %v203 = vrot.slane %v202, 1
    %v204 = vmax.f32 %v202, %v203
    %v205 = vld [vmem:[%s32] sm:$0xff]
    %v206 = vrot.slane %v205, 4
    %v207 = vmax.f32 %v205, %v206
    %v208 = vrot.slane %v207, 2
    %v209 = vmax.f32 %v207, %v208
    %v210 = vrot.slane %v209, 1
    %v211 = vmax.f32 %v209, %v210
    %v212 = vmax.f32 %v204, %v211
    %v213 = vld [vmem:[%s43] sm:$0xff]
    %v214 = vrot.slane %v213, 4
    %v215 = vmax.f32 %v213, %v214
    %v216 = vrot.slane %v215, 2
    %v217 = vmax.f32 %v215, %v216
    %v218 = vrot.slane %v217, 1
    %v219 = vmax.f32 %v217, %v218
    %v220 = vmax.f32 %v212, %v219
    %v221 = vld [vmem:[%s54] sm:$0xff]
    %v222 = vrot.slane %v221, 4
    %v223 = vmax.f32 %v221, %v222
    %v224 = vrot.slane %v223, 2
    %v225 = vmax.f32 %v223, %v224
    %v226 = vrot.slane %v225, 1
    %v227 = vmax.f32 %v225, %v226
    %v228 = vmax.f32 %v220, %v227
    %v229 = vld [vmem:[%s65] sm:$0xff]
    %v230 = vrot.slane %v229, 4
    %v231 = vmax.f32 %v229, %v230
    %v232 = vrot.slane %v231, 2
    %v233 = vmax.f32 %v231, %v232
    %v234 = vrot.slane %v233, 1
    %v235 = vmax.f32 %v233, %v234
    %v236 = vmax.f32 %v228, %v235
    %v237 = vld [vmem:[%s76] sm:$0xff]
    %v238 = vrot.slane %v237, 4
    %v239 = vmax.f32 %v237, %v238
    %v240 = vrot.slane %v239, 2
    %v241 = vmax.f32 %v239, %v240
    %v242 = vrot.slane %v241, 1
    %v243 = vmax.f32 %v241, %v242
    %v244 = vmax.f32 %v236, %v243
    %v245 = vld [vmem:[%s87] sm:$0xff]
    %v246 = vrot.slane %v245, 4
    %v247 = vmax.f32 %v245, %v246
    %v248 = vrot.slane %v247, 2
    %v249 = vmax.f32 %v247, %v248
    %v250 = vrot.slane %v249, 1
    %v251 = vmax.f32 %v249, %v250
    %v252 = vmax.f32 %v244, %v251
    %v253 = vld [vmem:[%s98] sm:$0xff]
    %v254 = vrot.slane %v253, 4
    %v255 = vmax.f32 %v253, %v254
    %v256 = vrot.slane %v255, 2
    %v257 = vmax.f32 %v255, %v256
    %v258 = vrot.slane %v257, 1
    %v259 = vmax.f32 %v257, %v258
    %v260 = vmax.f32 %v252, %v259
    %261 = vst [vmem:[#allocation5 + $0x1] sm:$0x1] %v260
    %v262 = vld [vmem:[#allocation2 + $0x8] sm:$0xff]
    %v263 = vrot.slane %v262, 4
    %v264 = vmax.f32 %v262, %v263
    %v265 = vrot.slane %v264, 2
    %v266 = vmax.f32 %v264, %v265
    %v267 = vrot.slane %v266, 1
    %v268 = vmax.f32 %v266, %v267
    %v269 = vld [vmem:[%s32 + $0x8] sm:$0xff]
    %v270 = vrot.slane %v269, 4
    %v271 = vmax.f32 %v269, %v270
    %v272 = vrot.slane %v271, 2
    %v273 = vmax.f32 %v271, %v272
    %v274 = vrot.slane %v273, 1
    %v275 = vmax.f32 %v273, %v274
    %v276 = vmax.f32 %v268, %v275
    %v277 = vld [vmem:[%s43 + $0x8] sm:$0xff]
    %v278 = vrot.slane %v277, 4
    %v279 = vmax.f32 %v277, %v278
    %v280 = vrot.slane %v279, 2
    %v281 = vmax.f32 %v279, %v280
    %v282 = vrot.slane %v281, 1
    %v283 = vmax.f32 %v281, %v282
    %v284 = vmax.f32 %v276, %v283
    %v285 = vld [vmem:[%s54 + $0x8] sm:$0xff]
    %v286 = vrot.slane %v285, 4
    %v287 = vmax.f32 %v285, %v286
    %v288 = vrot.slane %v287, 2
    %v289 = vmax.f32 %v287, %v288
    %v290 = vrot.slane %v289, 1
    %v291 = vmax.f32 %v289, %v290
    %v292 = vmax.f32 %v284, %v291
    %v293 = vld [vmem:[%s65 + $0x8] sm:$0xff]
    %v294 = vrot.slane %v293, 4
    %v295 = vmax.f32 %v293, %v294
    %v296 = vrot.slane %v295, 2
    %v297 = vmax.f32 %v295, %v296
    %v298 = vrot.slane %v297, 1
    %v299 = vmax.f32 %v297, %v298
    %v300 = vmax.f32 %v292, %v299
    %v301 = vld [vmem:[%s76 + $0x8] sm:$0xff]
    %v302 = vrot.slane %v301, 4
    %v303 = vmax.f32 %v301, %v302
    %v304 = vrot.slane %v303, 2
    %v305 = vmax.f32 %v303, %v304
    %v306 = vrot.slane %v305, 1
    %v307 = vmax.f32 %v305, %v306
    %v308 = vmax.f32 %v300, %v307
    %v309 = vld [vmem:[%s87 + $0x8] sm:$0xff]
    %v310 = vrot.slane %v309, 4
    %v311 = vmax.f32 %v309, %v310
    %v312 = vrot.slane %v311, 2
    %v313 = vmax.f32 %v311, %v312
    %v314 = vrot.slane %v313, 1
    %v315 = vmax.f32 %v313, %v314
    %v316 = vmax.f32 %v308, %v315
    %v317 = vld [vmem:[%s98 + $0x8] sm:$0xff]
    %v318 = vrot.slane %v317, 4
    %v319 = vmax.f32 %v317, %v318
    %v320 = vrot.slane %v319, 2
    %v321 = vmax.f32 %v319, %v320
    %v322 = vrot.slane %v321, 1
    %v323 = vmax.f32 %v321, %v322
    %v324 = vmax.f32 %v316, %v323
    %325 = vst [vmem:[#allocation5 + $0x2] sm:$0x1] %v324
    %v326 = vld [vmem:[%s109] sm:$0xff]
    %v327 = vrot.slane %v326, 4
    %v328 = vmax.f32 %v326, %v327
    %v329 = vrot.slane %v328, 2
    %v330 = vmax.f32 %v328, %v329
    %v331 = vrot.slane %v330, 1
    %v332 = vmax.f32 %v330, %v331
    %v333 = vld [vmem:[%s120] sm:$0xff]
    %v334 = vrot.slane %v333, 4
    %v335 = vmax.f32 %v333, %v334
    %v336 = vrot.slane %v335, 2
    %v337 = vmax.f32 %v335, %v336
    %v338 = vrot.slane %v337, 1
    %v339 = vmax.f32 %v337, %v338
    %v340 = vmax.f32 %v332, %v339
    %v341 = vld [vmem:[%s131] sm:$0xff]
    %v342 = vrot.slane %v341, 4
    %v343 = vmax.f32 %v341, %v342
    %v344 = vrot.slane %v343, 2
    %v345 = vmax.f32 %v343, %v344
    %v346 = vrot.slane %v345, 1
    %v347 = vmax.f32 %v345, %v346
    %v348 = vmax.f32 %v340, %v347
    %v349 = vld [vmem:[%s142] sm:$0xff]
    %v350 = vrot.slane %v349, 4
    %v351 = vmax.f32 %v349, %v350
    %v352 = vrot.slane %v351, 2
    %v353 = vmax.f32 %v351, %v352
    %v354 = vrot.slane %v353, 1
    %v355 = vmax.f32 %v353, %v354
    %v356 = vmax.f32 %v348, %v355
    %v357 = vld [vmem:[%s153] sm:$0xff]
    %v358 = vrot.slane %v357, 4
    %v359 = vmax.f32 %v357, %v358
    %v360 = vrot.slane %v359, 2
    %v361 = vmax.f32 %v359, %v360
    %v362 = vrot.slane %v361, 1
    %v363 = vmax.f32 %v361, %v362
    %v364 = vmax.f32 %v356, %v363
    %v365 = vld [vmem:[%s164] sm:$0xff]
    %v366 = vrot.slane %v365, 4
    %v367 = vmax.f32 %v365, %v366
    %v368 = vrot.slane %v367, 2
    %v369 = vmax.f32 %v367, %v368
    %v370 = vrot.slane %v369, 1
    %v371 = vmax.f32 %v369, %v370
    %v372 = vmax.f32 %v364, %v371
    %v373 = vld [vmem:[%s175] sm:$0xff]
    %v374 = vrot.slane %v373, 4
    %v375 = vmax.f32 %v373, %v374
    %v376 = vrot.slane %v375, 2
    %v377 = vmax.f32 %v375, %v376
    %v378 = vrot.slane %v377, 1
    %v379 = vmax.f32 %v377, %v378
    %v380 = vmax.f32 %v372, %v379
    %v381 = vld [vmem:[%s186] sm:$0xff]
    %v382 = vrot.slane %v381, 4
    %v383 = vmax.f32 %v381, %v382
    %v384 = vrot.slane %v383, 2
    %v385 = vmax.f32 %v383, %v384
    %v386 = vrot.slane %v385, 1
    %v387 = vmax.f32 %v385, %v386
    %v388 = vmax.f32 %v380, %v387
    %389 = vst [vmem:[#allocation5 + $0x3] sm:$0x1] %v388
    %v390 = vld [vmem:[%s109 + $0x8] sm:$0xff]
    %v391 = vrot.slane %v390, 4
    %v392 = vmax.f32 %v390, %v391
    %v393 = vrot.slane %v392, 2
    %v394 = vmax.f32 %v392, %v393
    %v395 = vrot.slane %v394, 1
    %v396 = vmax.f32 %v394, %v395
    %v397 = vld [vmem:[%s120 + $0x8] sm:$0xff]
    %v398 = vrot.slane %v397, 4
    %v399 = vmax.f32 %v397, %v398
    %v400 = vrot.slane %v399, 2
    %v401 = vmax.f32 %v399, %v400
    %v402 = vrot.slane %v401, 1
    %v403 = vmax.f32 %v401, %v402
    %v404 = vmax.f32 %v396, %v403
    %v405 = vld [vmem:[%s131 + $0x8] sm:$0xff]
    %v406 = vrot.slane %v405, 4
    %v407 = vmax.f32 %v405, %v406
    %v408 = vrot.slane %v407, 2
    %v409 = vmax.f32 %v407, %v408
    %v410 = vrot.slane %v409, 1
    %v411 = vmax.f32 %v409, %v410
    %v412 = vmax.f32 %v404, %v411
    %v413 = vld [vmem:[%s142 + $0x8] sm:$0xff]
    %v414 = vrot.slane %v413, 4
    %v415 = vmax.f32 %v413, %v414
    %v416 = vrot.slane %v415, 2
    %v417 = vmax.f32 %v415, %v416
    %v418 = vrot.slane %v417, 1
    %v419 = vmax.f32 %v417, %v418
    %v420 = vmax.f32 %v412, %v419
    %v421 = vld [vmem:[%s153 + $0x8] sm:$0xff]
    %v422 = vrot.slane %v421, 4
    %v423 = vmax.f32 %v421, %v422
    %v424 = vrot.slane %v423, 2
    %v425 = vmax.f32 %v423, %v424
    %v426 = vrot.slane %v425, 1
    %v427 = vmax.f32 %v425, %v426
    %v428 = vmax.f32 %v420, %v427
    %v429 = vld [vmem:[%s164 + $0x8] sm:$0xff]
    %v430 = vrot.slane %v429, 4
    %v431 = vmax.f32 %v429, %v430
    %v432 = vrot.slane %v431, 2
    %v433 = vmax.f32 %v431, %v432
    %v434 = vrot.slane %v433, 1
    %v435 = vmax.f32 %v433, %v434
    %v436 = vmax.f32 %v428, %v435
    %v437 = vld [vmem:[%s175 + $0x8] sm:$0xff]
    %v438 = vrot.slane %v437, 4
    %v439 = vmax.f32 %v437, %v438
    %v440 = vrot.slane %v439, 2
    %v441 = vmax.f32 %v439, %v440
    %v442 = vrot.slane %v441, 1
    %v443 = vmax.f32 %v441, %v442
    %v444 = vmax.f32 %v436, %v443
    %v445 = vld [vmem:[%s186 + $0x8] sm:$0xff]
    %v446 = vrot.slane %v445, 4
    %v447 = vmax.f32 %v445, %v446
    %v448 = vrot.slane %v447, 2
    %v449 = vmax.f32 %v447, %v448
    %v450 = vrot.slane %v449, 1
    %v451 = vmax.f32 %v449, %v450
    %v452 = vmax.f32 %v444, %v451
    %453 = vst [vmem:[#allocation5 + $0x4] sm:$0x1] %v452
    %v454 = vld [vmem:[#allocation2] sm:$0x1f]
    %vm455 = vcmask 1044480
    %v456 = vsel %vm455, %v454, -inf
    %v457 = vrot.slane %v456, 4
    %v458 = vmax.f32 %v456, %v457
    %v459 = vrot.slane %v458, 2
    %v460 = vmax.f32 %v458, %v459
    %v461 = vrot.slane %v460, 1
    %v462 = vmax.f32 %v460, %v461
    %v463 = vld [vmem:[%s32] sm:$0x1f]
    %v464 = vsel %vm455, %v463, -inf
    %v465 = vrot.slane %v464, 4
    %v466 = vmax.f32 %v464, %v465
    %v467 = vrot.slane %v466, 2
    %v468 = vmax.f32 %v466, %v467
    %v469 = vrot.slane %v468, 1
    %v470 = vmax.f32 %v468, %v469
    %v471 = vmax.f32 %v462, %v470
    %v472 = vld [vmem:[%s43] sm:$0x1f]
    %v473 = vsel %vm455, %v472, -inf
    %v474 = vrot.slane %v473, 4
    %v475 = vmax.f32 %v473, %v474
    %v476 = vrot.slane %v475, 2
    %v477 = vmax.f32 %v475, %v476
    %v478 = vrot.slane %v477, 1
    %v479 = vmax.f32 %v477, %v478
    %v480 = vmax.f32 %v471, %v479
    %v481 = vld [vmem:[%s54] sm:$0x1f]
    %v482 = vsel %vm455, %v481, -inf
    %v483 = vrot.slane %v482, 4
    %v484 = vmax.f32 %v482, %v483
    %v485 = vrot.slane %v484, 2
    %v486 = vmax.f32 %v484, %v485
    %v487 = vrot.slane %v486, 1
    %v488 = vmax.f32 %v486, %v487
    %v489 = vmax.f32 %v480, %v488
    %v490 = vld [vmem:[%s65] sm:$0x1f]
    %v491 = vsel %vm455, %v490, -inf
    %v492 = vrot.slane %v491, 4
    %v493 = vmax.f32 %v491, %v492
    %v494 = vrot.slane %v493, 2
    %v495 = vmax.f32 %v493, %v494
    %v496 = vrot.slane %v495, 1
    %v497 = vmax.f32 %v495, %v496
    %v498 = vmax.f32 %v489, %v497
    %499 = vst [vmem:[#allocation5 + $0x5] sm:$0x1] %v498
    %v500 = vld [vmem:[#allocation2 + $0x5] sm:$0x3f]
    %vm501 = vcmask 1045504
    %v502 = vsel %vm501, %v500, -inf
    %v503 = vrot.slane %v502, 4
    %v504 = vmax.f32 %v502, %v503
    %v505 = vrot.slane %v504, 2
    %v506 = vmax.f32 %v504, %v505
    %v507 = vrot.slane %v506, 1
    %v508 = vmax.f32 %v506, %v507
    %v509 = vld [vmem:[%s32 + $0x5] sm:$0x3f]
    %v510 = vsel %vm501, %v509, -inf
    %v511 = vrot.slane %v510, 4
    %v512 = vmax.f32 %v510, %v511
    %v513 = vrot.slane %v512, 2
    %v514 = vmax.f32 %v512, %v513
    %v515 = vrot.slane %v514, 1
    %v516 = vmax.f32 %v514, %v515
    %v517 = vmax.f32 %v508, %v516
    %v518 = vld [vmem:[%s43 + $0x5] sm:$0x3f]
    %v519 = vsel %vm501, %v518, -inf
    %v520 = vrot.slane %v519, 4
    %v521 = vmax.f32 %v519, %v520
    %v522 = vrot.slane %v521, 2
    %v523 = vmax.f32 %v521, %v522
    %v524 = vrot.slane %v523, 1
    %v525 = vmax.f32 %v523, %v524
    %v526 = vmax.f32 %v517, %v525
    %v527 = vld [vmem:[%s54 + $0x5] sm:$0x3f]
    %v528 = vsel %vm501, %v527, -inf
    %v529 = vrot.slane %v528, 4
    %v530 = vmax.f32 %v528, %v529
    %v531 = vrot.slane %v530, 2
    %v532 = vmax.f32 %v530, %v531
    %v533 = vrot.slane %v532, 1
    %v534 = vmax.f32 %v532, %v533
    %v535 = vmax.f32 %v526, %v534
    %v536 = vld [vmem:[%s65 + $0x5] sm:$0x3f]
    %v537 = vsel %vm501, %v536, -inf
    %v538 = vrot.slane %v537, 4
    %v539 = vmax.f32 %v537, %v538
    %v540 = vrot.slane %v539, 2
    %v541 = vmax.f32 %v539, %v540
    %v542 = vrot.slane %v541, 1
    %v543 = vmax.f32 %v541, %v542
    %v544 = vmax.f32 %v535, %v543
    %545 = vst [vmem:[#allocation5 + $0x6] sm:$0x1] %v544
    %v546 = vld [vmem:[#allocation2 + $0xb] sm:$0x1f]
    %v547 = vsel %vm455, %v546, -inf
    %v548 = vrot.slane %v547, 4
    %v549 = vmax.f32 %v547, %v548
    %v550 = vrot.slane %v549, 2
    %v551 = vmax.f32 %v549, %v550
    %v552 = vrot.slane %v551, 1
    %v553 = vmax.f32 %v551, %v552
    %v554 = vld [vmem:[%s32 + $0xb] sm:$0x1f]
    %v555 = vsel %vm455, %v554, -inf
    %v556 = vrot.slane %v555, 4
    %v557 = vmax.f32 %v555, %v556
    %v558 = vrot.slane %v557, 2
    %v559 = vmax.f32 %v557, %v558
    %v560 = vrot.slane %v559, 1
    %v561 = vmax.f32 %v559, %v560
    %v562 = vmax.f32 %v553, %v561
    %v563 = vld [vmem:[%s43 + $0xb] sm:$0x1f]
    %v564 = vsel %vm455, %v563, -inf
    %v565 = vrot.slane %v564, 4
    %v566 = vmax.f32 %v564, %v565
    %v567 = vrot.slane %v566, 2
    %v568 = vmax.f32 %v566, %v567
    %v569 = vrot.slane %v568, 1
    %v570 = vmax.f32 %v568, %v569
    %v571 = vmax.f32 %v562, %v570
    %v572 = vld [vmem:[%s54 + $0xb] sm:$0x1f]
    %v573 = vsel %vm455, %v572, -inf
    %v574 = vrot.slane %v573, 4
    %v575 = vmax.f32 %v573, %v574
    %v576 = vrot.slane %v575, 2
    %v577 = vmax.f32 %v575, %v576
    %v578 = vrot.slane %v577, 1
    %v579 = vmax.f32 %v577, %v578
    %v580 = vmax.f32 %v571, %v579
    %v581 = vld [vmem:[%s65 + $0xb] sm:$0x1f]
    %v582 = vsel %vm455, %v581, -inf
    %v583 = vrot.slane %v582, 4
    %v584 = vmax.f32 %v582, %v583
    %v585 = vrot.slane %v584, 2
    %v586 = vmax.f32 %v584, %v585
    %v587 = vrot.slane %v586, 1
    %v588 = vmax.f32 %v586, %v587
    %v589 = vmax.f32 %v580, %v588
    %590 = vst [vmem:[#allocation5 + $0x7] sm:$0x1] %v589
    %v591 = vld [vmem:[%s76] sm:$0x1f]
    %v592 = vsel %vm455, %v591, -inf
    %v593 = vrot.slane %v592, 4
    %v594 = vmax.f32 %v592, %v593
    %v595 = vrot.slane %v594, 2
    %v596 = vmax.f32 %v594, %v595
    %v597 = vrot.slane %v596, 1
    %v598 = vmax.f32 %v596, %v597
    %v599 = vld [vmem:[%s87] sm:$0x1f]
    %v600 = vsel %vm455, %v599, -inf
    %v601 = vrot.slane %v600, 4
    %v602 = vmax.f32 %v600, %v601
    %v603 = vrot.slane %v602, 2
    %v604 = vmax.f32 %v602, %v603
    %v605 = vrot.slane %v604, 1
    %v606 = vmax.f32 %v604, %v605
    %v607 = vmax.f32 %v598, %v606
    %v608 = vld [vmem:[%s98] sm:$0x1f]
    %v609 = vsel %vm455, %v608, -inf
    %v610 = vrot.slane %v609, 4
    %v611 = vmax.f32 %v609, %v610
    %v612 = vrot.slane %v611, 2
    %v613 = vmax.f32 %v611, %v612
    %v614 = vrot.slane %v613, 1
    %v615 = vmax.f32 %v613, %v614
    %v616 = vmax.f32 %v607, %v615
    %v617 = vld [vmem:[%s109] sm:$0x1f]
    %v618 = vsel %vm455, %v617, -inf
    %v619 = vrot.slane %v618, 4
    %v620 = vmax.f32 %v618, %v619
    %v621 = vrot.slane %v620, 2
    %v622 = vmax.f32 %v620, %v621
    %v623 = vrot.slane %v622, 1
    %v624 = vmax.f32 %v622, %v623
    %v625 = vmax.f32 %v616, %v624
    %v626 = vld [vmem:[%s120] sm:$0x1f]
    %v627 = vsel %vm455, %v626, -inf
    %v628 = vrot.slane %v627, 4
    %v629 = vmax.f32 %v627, %v628
    %v630 = vrot.slane %v629, 2
    %v631 = vmax.f32 %v629, %v630
    %v632 = vrot.slane %v631, 1
    %v633 = vmax.f32 %v631, %v632
    %v634 = vmax.f32 %v625, %v633
    %v635 = vld [vmem:[%s131] sm:$0x1f]
    %v636 = vsel %vm455, %v635, -inf
    %v637 = vrot.slane %v636, 4
    %v638 = vmax.f32 %v636, %v637
    %v639 = vrot.slane %v638, 2
    %v640 = vmax.f32 %v638, %v639
    %v641 = vrot.slane %v640, 1
    %v642 = vmax.f32 %v640, %v641
    %v643 = vmax.f32 %v634, %v642
    %644 = vst [vmem:[#allocation5 + $0x8] sm:$0x1] %v643
    %v645 = vld [vmem:[%s76 + $0x5] sm:$0x3f]
    %v646 = vsel %vm501, %v645, -inf
    %v647 = vrot.slane %v646, 4
    %v648 = vmax.f32 %v646, %v647
    %v649 = vrot.slane %v648, 2
    %v650 = vmax.f32 %v648, %v649
    %v651 = vrot.slane %v650, 1
    %v652 = vmax.f32 %v650, %v651
    %v653 = vld [vmem:[%s87 + $0x5] sm:$0x3f]
    %v654 = vsel %vm501, %v653, -inf
    %v655 = vrot.slane %v654, 4
    %v656 = vmax.f32 %v654, %v655
    %v657 = vrot.slane %v656, 2
    %v658 = vmax.f32 %v656, %v657
    %v659 = vrot.slane %v658, 1
    %v660 = vmax.f32 %v658, %v659
    %v661 = vmax.f32 %v652, %v660
    %v662 = vld [vmem:[%s98 + $0x5] sm:$0x3f]
    %v663 = vsel %vm501, %v662, -inf
    %v664 = vrot.slane %v663, 4
    %v665 = vmax.f32 %v663, %v664
    %v666 = vrot.slane %v665, 2
    %v667 = vmax.f32 %v665, %v666
    %v668 = vrot.slane %v667, 1
    %v669 = vmax.f32 %v667, %v668
    %v670 = vmax.f32 %v661, %v669
    %v671 = vld [vmem:[%s109 + $0x5] sm:$0x3f]
    %v672 = vsel %vm501, %v671, -inf
    %v673 = vrot.slane %v672, 4
    %v674 = vmax.f32 %v672, %v673
    %v675 = vrot.slane %v674, 2
    %v676 = vmax.f32 %v674, %v675
    %v677 = vrot.slane %v676, 1
    %v678 = vmax.f32 %v676, %v677
    %v679 = vmax.f32 %v670, %v678
    %v680 = vld [vmem:[%s120 + $0x5] sm:$0x3f]
    %v681 = vsel %vm501, %v680, -inf
    %v682 = vrot.slane %v681, 4
    %v683 = vmax.f32 %v681, %v682
    %v684 = vrot.slane %v683, 2
    %v685 = vmax.f32 %v683, %v684
    %v686 = vrot.slane %v685, 1
    %v687 = vmax.f32 %v685, %v686
    %v688 = vmax.f32 %v679, %v687
    %v689 = vld [vmem:[%s131 + $0x5] sm:$0x3f]
    %v690 = vsel %vm501, %v689, -inf
    %v691 = vrot.slane %v690, 4
    %v692 = vmax.f32 %v690, %v691
    %v693 = vrot.slane %v692, 2
    %v694 = vmax.f32 %v692, %v693
    %v695 = vrot.slane %v694, 1
    %v696 = vmax.f32 %v694, %v695
    %v697 = vmax.f32 %v688, %v696
    %698 = vst [vmem:[#allocation5 + $0x9] sm:$0x1] %v697
    %v699 = vld [vmem:[%s76 + $0xb] sm:$0x1f]
    %v700 = vsel %vm455, %v699, -inf
    %v701 = vrot.slane %v700, 4
    %v702 = vmax.f32 %v700, %v701
    %v703 = vrot.slane %v702, 2
    %v704 = vmax.f32 %v702, %v703
    %v705 = vrot.slane %v704, 1
    %v706 = vmax.f32 %v704, %v705
    %v707 = vld [vmem:[%s87 + $0xb] sm:$0x1f]
    %v708 = vsel %vm455, %v707, -inf
    %v709 = vrot.slane %v708, 4
    %v710 = vmax.f32 %v708, %v709
    %v711 = vrot.slane %v710, 2
    %v712 = vmax.f32 %v710, %v711
    %v713 = vrot.slane %v712, 1
    %v714 = vmax.f32 %v712, %v713
    %v715 = vmax.f32 %v706, %v714
    %v716 = vld [vmem:[%s98 + $0xb] sm:$0x1f]
    %v717 = vsel %vm455, %v716, -inf
    %v718 = vrot.slane %v717, 4
    %v719 = vmax.f32 %v717, %v718
    %v720 = vrot.slane %v719, 2
    %v721 = vmax.f32 %v719, %v720
    %v722 = vrot.slane %v721, 1
    %v723 = vmax.f32 %v721, %v722
    %v724 = vmax.f32 %v715, %v723
    %v725 = vld [vmem:[%s109 + $0xb] sm:$0x1f]
    %v726 = vsel %vm455, %v725, -inf
    %v727 = vrot.slane %v726, 4
    %v728 = vmax.f32 %v726, %v727
    %v729 = vrot.slane %v728, 2
    %v730 = vmax.f32 %v728, %v729
    %v731 = vrot.slane %v730, 1
    %v732 = vmax.f32 %v730, %v731
    %v733 = vmax.f32 %v724, %v732
    %v734 = vld [vmem:[%s120 + $0xb] sm:$0x1f]
    %v735 = vsel %vm455, %v734, -inf
    %v736 = vrot.slane %v735, 4
    %v737 = vmax.f32 %v735, %v736
    %v738 = vrot.slane %v737, 2
    %v739 = vmax.f32 %v737, %v738
    %v740 = vrot.slane %v739, 1
    %v741 = vmax.f32 %v739, %v740
    %v742 = vmax.f32 %v733, %v741
    %v743 = vld [vmem:[%s131 + $0xb] sm:$0x1f]
    %v744 = vsel %vm455, %v743, -inf
    %v745 = vrot.slane %v744, 4
    %v746 = vmax.f32 %v744, %v745
    %v747 = vrot.slane %v746, 2
    %v748 = vmax.f32 %v746, %v747
    %v749 = vrot.slane %v748, 1
    %v750 = vmax.f32 %v748, %v749
    %v751 = vmax.f32 %v742, %v750
    %752 = vst [vmem:[#allocation5 + $0xa] sm:$0x1] %v751
    %v753 = vld [vmem:[%s142] sm:$0x1f]
    %v754 = vsel %vm455, %v753, -inf
    %v755 = vrot.slane %v754, 4
    %v756 = vmax.f32 %v754, %v755
    %v757 = vrot.slane %v756, 2
    %v758 = vmax.f32 %v756, %v757
    %v759 = vrot.slane %v758, 1
    %v760 = vmax.f32 %v758, %v759
    %v761 = vld [vmem:[%s153] sm:$0x1f]
    %v762 = vsel %vm455, %v761, -inf
    %v763 = vrot.slane %v762, 4
    %v764 = vmax.f32 %v762, %v763
    %v765 = vrot.slane %v764, 2
    %v766 = vmax.f32 %v764, %v765
    %v767 = vrot.slane %v766, 1
    %v768 = vmax.f32 %v766, %v767
    %v769 = vmax.f32 %v760, %v768
    %v770 = vld [vmem:[%s164] sm:$0x1f]
    %v771 = vsel %vm455, %v770, -inf
    %v772 = vrot.slane %v771, 4
    %v773 = vmax.f32 %v771, %v772
    %v774 = vrot.slane %v773, 2
    %v775 = vmax.f32 %v773, %v774
    %v776 = vrot.slane %v775, 1
    %v777 = vmax.f32 %v775, %v776
    %v778 = vmax.f32 %v769, %v777
    %v779 = vld [vmem:[%s175] sm:$0x1f]
    %v780 = vsel %vm455, %v779, -inf
    %v781 = vrot.slane %v780, 4
    %v782 = vmax.f32 %v780, %v781
    %v783 = vrot.slane %v782, 2
    %v784 = vmax.f32 %v782, %v783
    %v785 = vrot.slane %v784, 1
    %v786 = vmax.f32 %v784, %v785
    %v787 = vmax.f32 %v778, %v786
    %v788 = vld [vmem:[%s186] sm:$0x1f]
    %v789 = vsel %vm455, %v788, -inf
    %v790 = vrot.slane %v789, 4
    %v791 = vmax.f32 %v789, %v790
    %v792 = vrot.slane %v791, 2
    %v793 = vmax.f32 %v791, %v792
    %v794 = vrot.slane %v793, 1
    %v795 = vmax.f32 %v793, %v794
    %v796 = vmax.f32 %v787, %v795
    %797 = vst [vmem:[#allocation5 + $0xb] sm:$0x1] %v796
    %v798 = vld [vmem:[%s142 + $0x5] sm:$0x3f]
    %v799 = vsel %vm501, %v798, -inf
    %v800 = vrot.slane %v799, 4
    %v801 = vmax.f32 %v799, %v800
    %v802 = vrot.slane %v801, 2
    %v803 = vmax.f32 %v801, %v802
    %v804 = vrot.slane %v803, 1
    %v805 = vmax.f32 %v803, %v804
    %v806 = vld [vmem:[%s153 + $0x5] sm:$0x3f]
    %v807 = vsel %vm501, %v806, -inf
    %v808 = vrot.slane %v807, 4
    %v809 = vmax.f32 %v807, %v808
    %v810 = vrot.slane %v809, 2
    %v811 = vmax.f32 %v809, %v810
    %v812 = vrot.slane %v811, 1
    %v813 = vmax.f32 %v811, %v812
    %v814 = vmax.f32 %v805, %v813
    %v815 = vld [vmem:[%s164 + $0x5] sm:$0x3f]
    %v816 = vsel %vm501, %v815, -inf
    %v817 = vrot.slane %v816, 4
    %v818 = vmax.f32 %v816, %v817
    %v819 = vrot.slane %v818, 2
    %v820 = vmax.f32 %v818, %v819
    %v821 = vrot.slane %v820, 1
    %v822 = vmax.f32 %v820, %v821
    %v823 = vmax.f32 %v814, %v822
    %v824 = vld [vmem:[%s175 + $0x5] sm:$0x3f]
    %v825 = vsel %vm501, %v824, -inf
    %v826 = vrot.slane %v825, 4
    %v827 = vmax.f32 %v825, %v826
    %v828 = vrot.slane %v827, 2
    %v829 = vmax.f32 %v827, %v828
    %v830 = vrot.slane %v829, 1
    %v831 = vmax.f32 %v829, %v830
    %v832 = vmax.f32 %v823, %v831
    %v833 = vld [vmem:[%s186 + $0x5] sm:$0x3f]
    %v834 = vsel %vm501, %v833, -inf
    %v835 = vrot.slane %v834, 4
    %v836 = vmax.f32 %v834, %v835
    %v837 = vrot.slane %v836, 2
    %v838 = vmax.f32 %v836, %v837
    %v839 = vrot.slane %v838, 1
    %v840 = vmax.f32 %v838, %v839
    %v841 = vmax.f32 %v832, %v840
    %842 = vst [vmem:[#allocation5 + $0xc] sm:$0x1] %v841
    %v843 = vld [vmem:[%s142 + $0xb] sm:$0x1f]
    %v844 = vsel %vm455, %v843, -inf
    %v845 = vrot.slane %v844, 4
    %v846 = vmax.f32 %v844, %v845
    %v847 = vrot.slane %v846, 2
    %v848 = vmax.f32 %v846, %v847
    %v849 = vrot.slane %v848, 1
    %v850 = vmax.f32 %v848, %v849
    %v851 = vld [vmem:[%s153 + $0xb] sm:$0x1f]
    %v852 = vsel %vm455, %v851, -inf
    %v853 = vrot.slane %v852, 4
    %v854 = vmax.f32 %v852, %v853
    %v855 = vrot.slane %v854, 2
    %v856 = vmax.f32 %v854, %v855
    %v857 = vrot.slane %v856, 1
    %v858 = vmax.f32 %v856, %v857
    %v859 = vmax.f32 %v850, %v858
    %v860 = vld [vmem:[%s164 + $0xb] sm:$0x1f]
    %v861 = vsel %vm455, %v860, -inf
    %v862 = vrot.slane %v861, 4
    %v863 = vmax.f32 %v861, %v862
    %v864 = vrot.slane %v863, 2
    %v865 = vmax.f32 %v863, %v864
    %v866 = vrot.slane %v865, 1
    %v867 = vmax.f32 %v865, %v866
    %v868 = vmax.f32 %v859, %v867
    %v869 = vld [vmem:[%s175 + $0xb] sm:$0x1f]
    %v870 = vsel %vm455, %v869, -inf
    %v871 = vrot.slane %v870, 4
    %v872 = vmax.f32 %v870, %v871
    %v873 = vrot.slane %v872, 2
    %v874 = vmax.f32 %v872, %v873
    %v875 = vrot.slane %v874, 1
    %v876 = vmax.f32 %v874, %v875
    %v877 = vmax.f32 %v868, %v876
    %v878 = vld [vmem:[%s186 + $0xb] sm:$0x1f]
    %v879 = vsel %vm455, %v878, -inf
    %v880 = vrot.slane %v879, 4
    %v881 = vmax.f32 %v879, %v880
    %v882 = vrot.slane %v881, 2
    %v883 = vmax.f32 %v881, %v882
    %v884 = vrot.slane %v883, 1
    %v885 = vmax.f32 %v883, %v884
    %v886 = vmax.f32 %v877, %v885
    %887 = vst [vmem:[#allocation5 + $0xd] sm:$0x1] %v886
    // Predicated region
    $region10: #{tpu_custom_call.1} parent=1 // pred_check
      _
    $region11: #{tpu_custom_call.1} parent=1 // pred_check_branch
      %889 = sbr.rel (0) target = $region13
    $region12: #{tpu_custom_call.1} parent=1 // pred_region
      %s891 = ssub.s32 256, 256
      %892 = vsyncadd [#allocation4], %s891
      %s893 = sshll.u32 [#allocation5], 4
      %s894 = int_to_ptr.vmem [resolvable:$true] %s893
      %899 = dma.vmem_to_hbm [thread:$0]  %s894, 256, %s1, [#allocation4], 128, 128, 8
    $region13: #{tpu_custom_call.1} parent=1 // pred_fallthru
      _
    // Predicated region
    $region14: #{tpu_custom_call.1} parent=1 // pred_check
      _
    $region15: #{tpu_custom_call.1} parent=1 // pred_check_branch
      %901 = sbr.rel (0) target = $region17
    $region16: #{tpu_custom_call.1} parent=1 // pred_region
      %902 = dma.done [#allocation4], 256
    $region17: #{tpu_custom_call.1} parent=1 // pred_fallthru
      _
    %903 = vsyncpa [#allocation3], 1
    %904 = vsyncpa [#allocation4], 1

</llo_original>
